<compile_context>
chip_gen: v7x
topology: tpu7x:2x2x1
jax: 0.10.0
libtpu: 0.0.40
codegen_flags: <defaults>
</compile_context>

<pallas_src>
import jax
import jax.numpy as jnp
from jax import lax
from jax.experimental import pallas as pl
from jax.experimental.pallas import tpu as pltpu


def state_encoder_kernel(state_ref, ws_ref, bs_ref, wih_ref, whh_ref, b_ref,
                         out_ref, xg_sc):
    seq_batch, _ = state_ref.shape
    _, batch, h_dim = out_ref.shape
    four_h = whh_ref.shape[1]
    seq = seq_batch // batch

    # ---- hoisted, non-recurrent projections (done once) -------------------
    x = state_ref[...]                                            # (seq*batch, 4)
    emb = jnp.dot(x, ws_ref[...],
                  preferred_element_type=jnp.float32) + bs_ref[...]   # (seq*batch, emb)
    # x-side gate pre-activations for every timestep, gate order (i, f, g, o)
    xg_sc[...] = (jnp.dot(emb, wih_ref[...],
                          preferred_element_type=jnp.float32)
                  + b_ref[...])                                   # (seq*batch, 4*h)

    w_hh = whh_ref[...]                                           # (h_dim, 4*h)

    # ---- loop-invariant lane constants (hoisted; no in-loop broadcasts) ----
    lane = lax.broadcasted_iota(jnp.int32, (batch, four_h), 1)
    is_g = (lane >= 2 * h_dim) & (lane < 3 * h_dim)
    g_scale = jnp.where(is_g, 2.0, 1.0).astype(jnp.float32)      # 2 on g lanes
    g_off = g_scale - 1.0                                         # 1 on g lanes

    # ---- recurrence: h/c live as loop carries (vregs) ----------------------
    def step(t, carry):
        h_prev, c_prev = carry
        off = t * batch
        if batch % 8 == 0:
            off = pl.multiple_of(off, 8)                          # sublane-aligned
        x_g = xg_sc[pl.ds(off, batch), :]                         # (batch, 4*h)
        gates = x_g + jnp.dot(h_prev, w_hh,
                              preferred_element_type=jnp.float32)

        # One full-width EUP pass: sigmoid on i/f/o lanes; on g lanes use
        # tanh(x) = 2*sigmoid(2x) - 1, realized via the precomputed scale/offset.
        s = jax.nn.sigmoid(gates * g_scale)
        act = s * g_scale - g_off

        i_g = act[:, 0 * h_dim:1 * h_dim]
        f_g = act[:, 1 * h_dim:2 * h_dim]
        g_g = act[:, 2 * h_dim:3 * h_dim]
        o_g = act[:, 3 * h_dim:4 * h_dim]

        c_new = f_g * c_prev + i_g * g_g
        h_new = o_g * jnp.tanh(c_new)
        return h_new, c_new

    h0 = jnp.zeros((batch, h_dim), jnp.float32)
    c0 = jnp.zeros((batch, h_dim), jnp.float32)
    h_final, _ = lax.fori_loop(0, seq, step, (h0, c0), unroll=True)

    out_ref[0] = h_final.astype(out_ref.dtype)


def state_encoder_forward(state, w_state, b_state, w_ih, w_hh, b_gates):
    """state: (seq, batch, 4) f32 -> final_h: (1, batch, h_dim) f32.

    w_ih/w_hh: (4, emb|h, h) stacked per gate in PyTorch order (i, f, g, o);
    b_gates: (4, 1, h) holding bias_ih + bias_hh.
    """
    seq, batch, in_dim = state.shape
    emb_dim = w_state.shape[1]
    h_dim = w_hh.shape[2]
    four_h = 4 * h_dim

    # Fuse gate weights along the output axis, preserving (i, f, g, o) order.
    w_ih_fused = jnp.transpose(w_ih, (1, 0, 2)).reshape(emb_dim, four_h)
    w_hh_fused = jnp.transpose(w_hh, (1, 0, 2)).reshape(h_dim, four_h)
    b_fused = b_gates.reshape(1, four_h)

    # One flat (seq*batch, 4) slab: a single up-front DMA, no per-step tiling.
    state_2d = state.reshape(seq * batch, in_dim)

    grid_spec = pltpu.PrefetchScalarGridSpec(
        num_scalar_prefetch=0,
        grid=(1,),
        in_specs=[
            pl.BlockSpec((seq * batch, in_dim), lambda i: (0, 0)),   # state
            pl.BlockSpec((in_dim, emb_dim), lambda i: (0, 0)),       # state_layer W
            pl.BlockSpec((1, emb_dim), lambda i: (0, 0)),            # state_layer b
            pl.BlockSpec((emb_dim, four_h), lambda i: (0, 0)),       # W_ih fused
            pl.BlockSpec((h_dim, four_h), lambda i: (0, 0)),         # W_hh fused
            pl.BlockSpec((1, four_h), lambda i: (0, 0)),             # b_ih + b_hh
        ],
        out_specs=pl.BlockSpec((1, batch, h_dim), lambda i: (0, 0, 0)),
        scratch_shapes=[
            pltpu.VMEM((seq * batch, four_h), jnp.float32),   # hoisted x-side gates
        ],
    )

    return pl.pallas_call(
        state_encoder_kernel,
        out_shape=jax.ShapeDtypeStruct((1, batch, h_dim), jnp.float32),
        grid_spec=grid_spec,
        compiler_params=pltpu.CompilerParams(
            dimension_semantics=("arbitrary",)),
    )(state_2d, w_state, b_state, w_ih_fused, w_hh_fused, b_fused)


def state_encoder_reference(state, w_state, b_state, w_ih, w_hh, b_gates):
    """Pure-JAX reference (mirrors torch.nn.Linear + torch.nn.LSTM),
    using the *unfused* per-gate weights to independently check gate ordering."""
    seq, batch, _ = state.shape
    h_dim = w_hh.shape[2]
    hp = lax.Precision.HIGHEST

    emb = jnp.einsum('sbi,ie->sbe', state, w_state, precision=hp) + b_state[0]

    def step(carry, x_t):
        h, c = carry
        gates = [jnp.dot(x_t, w_ih[k], precision=hp)
                 + jnp.dot(h, w_hh[k], precision=hp)
                 + b_gates[k, 0] for k in range(4)]
        i = jax.nn.sigmoid(gates[0])
        f = jax.nn.sigmoid(gates[1])
        g = jnp.tanh(gates[2])
        o = jax.nn.sigmoid(gates[3])
        c_new = f * c + i * g
        h_new = o * jnp.tanh(c_new)
        return (h_new, c_new), None

    h0 = jnp.zeros((batch, h_dim), jnp.float32)
    c0 = jnp.zeros((batch, h_dim), jnp.float32)
    (h_final, _), _ = lax.scan(step, (h0, c0), emb)
    return h_final[None]                                   # (1, batch, h_dim)


if __name__ == "__main__":
    # Small, module-consistent shapes (4*h_dim = 128 fills the lane dim).
    seq, batch, in_dim = 8, 8, 4
    embedding_dim, h_dim, num_layers = 32, 32, 1

    key = jax.random.PRNGKey(0)
    ks = jax.random.split(key, 7)

    # Deterministic synthetic parameters (not a checkpoint load).
    w_state = 0.2 * jax.random.normal(ks[0], (in_dim, embedding_dim), jnp.float32)
    b_state = 0.1 * jax.random.normal(ks[1], (1, embedding_dim), jnp.float32)
    # LSTM weights stacked along gate axis in PyTorch order (i, f, g, o);
    # b_gates already holds bias_ih + bias_hh.
    w_ih = 0.2 * jax.random.normal(ks[2], (4, embedding_dim, h_dim), jnp.float32)
    w_hh = 0.2 * jax.random.normal(ks[3], (4, h_dim, h_dim), jnp.float32)
    b_gates = 0.1 * jax.random.normal(ks[4], (4, 1, h_dim), jnp.float32)

    # Input state(vx, vy, ax, ay): (seq, batch, 4)
    state = jax.random.normal(ks[5], (seq, batch, in_dim), jnp.float32)

    final_h = state_encoder_forward(state, w_state, b_state, w_ih, w_hh, b_gates)
    final_h = jax.block_until_ready(final_h)

    ref = state_encoder_reference(state, w_state, b_state, w_ih, w_hh, b_gates)
    assert final_h.shape == (num_layers, batch, h_dim), final_h.shape
    assert jnp.allclose(final_h, ref, atol=1e-4, rtol=1e-4), "mismatch vs reference"

    print("KERNEL_OK")
</pallas_src>

<mosaic_0001>
module attributes {stable_mosaic.version = 11 : i64} {
  func.func @state_encoder_kernel(%arg0: i32, %arg1: memref<64x4xf32, #tpu.memory_space<vmem>>, %arg2: memref<4x32xf32, #tpu.memory_space<vmem>>, %arg3: memref<1x32xf32, #tpu.memory_space<vmem>>, %arg4: memref<32x128xf32, #tpu.memory_space<vmem>>, %arg5: memref<32x128xf32, #tpu.memory_space<vmem>>, %arg6: memref<1x128xf32, #tpu.memory_space<vmem>>, %arg7: memref<1x8x32xf32, #tpu.memory_space<vmem>>, %arg8: memref<64x128xf32, #tpu.memory_space<vmem>>) attributes {dimension_semantics = [#tpu.dimension_semantics<arbitrary>], iteration_bounds = array<i64: 1>, scalar_prefetch = 0 : i64, scratch_operands = 1 : i64, tpu.core_type = #tpu.core_type<tc>, window_params = [{pipeline_mode = #tpu.pipeline_mode<synchronous>, transform_indices = @transform_0, window_bounds = array<i64: 64, 4>}, {pipeline_mode = #tpu.pipeline_mode<synchronous>, transform_indices = @transform_1, window_bounds = array<i64: 4, 32>}, {pipeline_mode = #tpu.pipeline_mode<synchronous>, transform_indices = @transform_2, window_bounds = array<i64: 1, 32>}, {pipeline_mode = #tpu.pipeline_mode<synchronous>, transform_indices = @transform_3, window_bounds = array<i64: 32, 128>}, {pipeline_mode = #tpu.pipeline_mode<synchronous>, transform_indices = @transform_4, window_bounds = array<i64: 32, 128>}, {pipeline_mode = #tpu.pipeline_mode<synchronous>, transform_indices = @transform_5, window_bounds = array<i64: 1, 128>}, {pipeline_mode = #tpu.pipeline_mode<synchronous>, transform_indices = @transform_6, window_bounds = array<i64: 1, 8, 32>}]} {
    %c0 = arith.constant 0 : index
    %c0_0 = arith.constant 0 : index
    %0 = vector.load %arg1[%c0, %c0_0] : memref<64x4xf32, #tpu.memory_space<vmem>>, vector<64x4xf32>
    %c0_1 = arith.constant 0 : index
    %c0_2 = arith.constant 0 : index
    %1 = vector.load %arg2[%c0_1, %c0_2] : memref<4x32xf32, #tpu.memory_space<vmem>>, vector<4x32xf32>
    %cst = arith.constant dense<0.000000e+00> : vector<64x32xf32>
    %2 = tpu.matmul %0, %1, %cst {dimension_numbers = #tpu.dot_dimension_numbers<[1], [0], [0], [1], [0, 0, 1, 1], [], []>} : vector<64x4xf32>, vector<4x32xf32>, vector<64x32xf32> -> vector<64x32xf32>
    %c0_3 = arith.constant 0 : index
    %c0_4 = arith.constant 0 : index
    %3 = vector.load %arg3[%c0_3, %c0_4] : memref<1x32xf32, #tpu.memory_space<vmem>>, vector<1x32xf32>
    %4 = vector.broadcast %3 : vector<1x32xf32> to vector<64x32xf32>
    %5 = arith.addf %2, %4 : vector<64x32xf32>
    %c0_5 = arith.constant 0 : index
    %c0_6 = arith.constant 0 : index
    %6 = vector.load %arg4[%c0_5, %c0_6] : memref<32x128xf32, #tpu.memory_space<vmem>>, vector<32x128xf32>
    %cst_7 = arith.constant dense<0.000000e+00> : vector<64x128xf32>
    %7 = tpu.matmul %5, %6, %cst_7 {dimension_numbers = #tpu.dot_dimension_numbers<[1], [0], [0], [1], [0, 0, 1, 1], [], []>} : vector<64x32xf32>, vector<32x128xf32>, vector<64x128xf32> -> vector<64x128xf32>
    %c0_8 = arith.constant 0 : index
    %c0_9 = arith.constant 0 : index
    %8 = vector.load %arg6[%c0_8, %c0_9] : memref<1x128xf32, #tpu.memory_space<vmem>>, vector<1x128xf32>
    %9 = vector.broadcast %8 : vector<1x128xf32> to vector<64x128xf32>
    %10 = arith.addf %7, %9 : vector<64x128xf32>
    %c0_10 = arith.constant 0 : index
    %c0_11 = arith.constant 0 : index
    %11 = vector.load %arg8[%c0_10, %c0_11] : memref<64x128xf32, #tpu.memory_space<vmem>>, vector<64x128xf32>
    tpu.vector_store %arg8[%c0_10, %c0_11], %10 {strides = array<i32>} : memref<64x128xf32, #tpu.memory_space<vmem>>, vector<64x128xf32>,
    %c0_12 = arith.constant 0 : index
    %c0_13 = arith.constant 0 : index
    %12 = vector.load %arg5[%c0_12, %c0_13] : memref<32x128xf32, #tpu.memory_space<vmem>>, vector<32x128xf32>
    %13 = tpu.iota {dimensions = array<i32: 1>} : vector<8x128xi32>
    %c64_i32 = arith.constant 64 : i32
    %14 = vector.broadcast %c64_i32 : i32 to vector<8x128xi32>
    %15 = arith.cmpi sge, %13, %14 : vector<8x128xi32>
    %c96_i32 = arith.constant 96 : i32
    %16 = vector.broadcast %c96_i32 : i32 to vector<8x128xi32>
    %17 = arith.cmpi slt, %13, %16 : vector<8x128xi32>
    %18 = arith.andi %15, %17 : vector<8x128xi1>
    %cst_14 = arith.constant 2.000000e+00 : f32
    %cst_15 = arith.constant 1.000000e+00 : f32
    %19 = vector.broadcast %cst_14 : f32 to vector<8x128xf32>
    %20 = vector.broadcast %cst_15 : f32 to vector<8x128xf32>
    %21 = arith.select %18, %19, %20 : vector<8x128xi1>, vector<8x128xf32>
    %cst_16 = arith.constant 1.000000e+00 : f32
    %22 = vector.broadcast %cst_16 : f32 to vector<8x128xf32>
    %23 = arith.subf %21, %22 : vector<8x128xf32>
    %cst_17 = arith.constant 0.000000e+00 : f32
    %24 = vector.broadcast %cst_17 : f32 to vector<8x32xf32>
    %cst_18 = arith.constant 0.000000e+00 : f32
    %25 = vector.broadcast %cst_18 : f32 to vector<8x32xf32>
    %c0_i32 = arith.constant 0 : i32
    %c8_i32 = arith.constant 8 : i32
    %26 = arith.muli %c0_i32, %c8_i32 : i32
    %27 = tpu.assume_multiple %26, 8 : i32
    %28 = arith.index_cast %27 : i32 to index
    %c0_19 = arith.constant 0 : index
    %29 = vector.load %arg8[%28, %c0_19] : memref<64x128xf32, #tpu.memory_space<vmem>>, vector<8x128xf32>
    %cst_20 = arith.constant dense<0.000000e+00> : vector<8x128xf32>
    %30 = tpu.matmul %24, %12, %cst_20 {dimension_numbers = #tpu.dot_dimension_numbers<[1], [0], [0], [1], [0, 0, 1, 1], [], []>} : vector<8x32xf32>, vector<32x128xf32>, vector<8x128xf32> -> vector<8x128xf32>
    %31 = arith.addf %29, %30 : vector<8x128xf32>
    %32 = arith.mulf %31, %21 : vector<8x128xf32>
    %33 = arith.negf %32 : vector<8x128xf32>
    %34 = math.exp %33 : vector<8x128xf32>
    %cst_21 = arith.constant 1.000000e+00 : f32
    %35 = vector.broadcast %cst_21 : f32 to vector<8x128xf32>
    %36 = arith.addf %35, %34 : vector<8x128xf32>
    %37 = arith.divf %35, %36 : vector<8x128xf32>
    %38 = arith.mulf %37, %21 : vector<8x128xf32>
    %39 = arith.subf %38, %23 : vector<8x128xf32>
    %40 = vector.extract_strided_slice %39 {offsets = [0, 0], sizes = [8, 32], strides = [1, 1]} : vector<8x128xf32> to vector<8x32xf32>
    %41 = vector.extract_strided_slice %39 {offsets = [0, 32], sizes = [8, 32], strides = [1, 1]} : vector<8x128xf32> to vector<8x32xf32>
    %42 = vector.extract_strided_slice %39 {offsets = [0, 64], sizes = [8, 32], strides = [1, 1]} : vector<8x128xf32> to vector<8x32xf32>
    %43 = vector.extract_strided_slice %39 {offsets = [0, 96], sizes = [8, 32], strides = [1, 1]} : vector<8x128xf32> to vector<8x32xf32>
    %44 = arith.mulf %41, %25 : vector<8x32xf32>
    %45 = arith.mulf %40, %42 : vector<8x32xf32>
    %46 = arith.addf %44, %45 : vector<8x32xf32>
    %47 = math.tanh %46 : vector<8x32xf32>
    %48 = arith.mulf %43, %47 : vector<8x32xf32>
    %c1_i32 = arith.constant 1 : i32
    %c8_i32_22 = arith.constant 8 : i32
    %49 = arith.muli %c1_i32, %c8_i32_22 : i32
    %50 = tpu.assume_multiple %49, 8 : i32
    %51 = arith.index_cast %50 : i32 to index
    %c0_23 = arith.constant 0 : index
    %52 = vector.load %arg8[%51, %c0_23] : memref<64x128xf32, #tpu.memory_space<vmem>>, vector<8x128xf32>
    %cst_24 = arith.constant dense<0.000000e+00> : vector<8x128xf32>
    %53 = tpu.matmul %48, %12, %cst_24 {dimension_numbers = #tpu.dot_dimension_numbers<[1], [0], [0], [1], [0, 0, 1, 1], [], []>} : vector<8x32xf32>, vector<32x128xf32>, vector<8x128xf32> -> vector<8x128xf32>
    %54 = arith.addf %52, %53 : vector<8x128xf32>
    %55 = arith.mulf %54, %21 : vector<8x128xf32>
    %56 = arith.negf %55 : vector<8x128xf32>
    %57 = math.exp %56 : vector<8x128xf32>
    %cst_25 = arith.constant 1.000000e+00 : f32
    %58 = vector.broadcast %cst_25 : f32 to vector<8x128xf32>
    %59 = arith.addf %58, %57 : vector<8x128xf32>
    %60 = arith.divf %58, %59 : vector<8x128xf32>
    %61 = arith.mulf %60, %21 : vector<8x128xf32>
    %62 = arith.subf %61, %23 : vector<8x128xf32>
    %63 = vector.extract_strided_slice %62 {offsets = [0, 0], sizes = [8, 32], strides = [1, 1]} : vector<8x128xf32> to vector<8x32xf32>
    %64 = vector.extract_strided_slice %62 {offsets = [0, 32], sizes = [8, 32], strides = [1, 1]} : vector<8x128xf32> to vector<8x32xf32>
    %65 = vector.extract_strided_slice %62 {offsets = [0, 64], sizes = [8, 32], strides = [1, 1]} : vector<8x128xf32> to vector<8x32xf32>
    %66 = vector.extract_strided_slice %62 {offsets = [0, 96], sizes = [8, 32], strides = [1, 1]} : vector<8x128xf32> to vector<8x32xf32>
    %67 = arith.mulf %64, %46 : vector<8x32xf32>
    %68 = arith.mulf %63, %65 : vector<8x32xf32>
    %69 = arith.addf %67, %68 : vector<8x32xf32>
    %70 = math.tanh %69 : vector<8x32xf32>
    %71 = arith.mulf %66, %70 : vector<8x32xf32>
    %c2_i32 = arith.constant 2 : i32
    %c8_i32_26 = arith.constant 8 : i32
    %72 = arith.muli %c2_i32, %c8_i32_26 : i32
    %73 = tpu.assume_multiple %72, 8 : i32
    %74 = arith.index_cast %73 : i32 to index
    %c0_27 = arith.constant 0 : index
    %75 = vector.load %arg8[%74, %c0_27] : memref<64x128xf32, #tpu.memory_space<vmem>>, vector<8x128xf32>
    %cst_28 = arith.constant dense<0.000000e+00> : vector<8x128xf32>
    %76 = tpu.matmul %71, %12, %cst_28 {dimension_numbers = #tpu.dot_dimension_numbers<[1], [0], [0], [1], [0, 0, 1, 1], [], []>} : vector<8x32xf32>, vector<32x128xf32>, vector<8x128xf32> -> vector<8x128xf32>
    %77 = arith.addf %75, %76 : vector<8x128xf32>
    %78 = arith.mulf %77, %21 : vector<8x128xf32>
    %79 = arith.negf %78 : vector<8x128xf32>
    %80 = math.exp %79 : vector<8x128xf32>
    %cst_29 = arith.constant 1.000000e+00 : f32
    %81 = vector.broadcast %cst_29 : f32 to vector<8x128xf32>
    %82 = arith.addf %81, %80 : vector<8x128xf32>
    %83 = arith.divf %81, %82 : vector<8x128xf32>
    %84 = arith.mulf %83, %21 : vector<8x128xf32>
    %85 = arith.subf %84, %23 : vector<8x128xf32>
    %86 = vector.extract_strided_slice %85 {offsets = [0, 0], sizes = [8, 32], strides = [1, 1]} : vector<8x128xf32> to vector<8x32xf32>
    %87 = vector.extract_strided_slice %85 {offsets = [0, 32], sizes = [8, 32], strides = [1, 1]} : vector<8x128xf32> to vector<8x32xf32>
    %88 = vector.extract_strided_slice %85 {offsets = [0, 64], sizes = [8, 32], strides = [1, 1]} : vector<8x128xf32> to vector<8x32xf32>
    %89 = vector.extract_strided_slice %85 {offsets = [0, 96], sizes = [8, 32], strides = [1, 1]} : vector<8x128xf32> to vector<8x32xf32>
    %90 = arith.mulf %87, %69 : vector<8x32xf32>
    %91 = arith.mulf %86, %88 : vector<8x32xf32>
    %92 = arith.addf %90, %91 : vector<8x32xf32>
    %93 = math.tanh %92 : vector<8x32xf32>
    %94 = arith.mulf %89, %93 : vector<8x32xf32>
    %c3_i32 = arith.constant 3 : i32
    %c8_i32_30 = arith.constant 8 : i32
    %95 = arith.muli %c3_i32, %c8_i32_30 : i32
    %96 = tpu.assume_multiple %95, 8 : i32
    %97 = arith.index_cast %96 : i32 to index
    %c0_31 = arith.constant 0 : index
    %98 = vector.load %arg8[%97, %c0_31] : memref<64x128xf32, #tpu.memory_space<vmem>>, vector<8x128xf32>
    %cst_32 = arith.constant dense<0.000000e+00> : vector<8x128xf32>
    %99 = tpu.matmul %94, %12, %cst_32 {dimension_numbers = #tpu.dot_dimension_numbers<[1], [0], [0], [1], [0, 0, 1, 1], [], []>} : vector<8x32xf32>, vector<32x128xf32>, vector<8x128xf32> -> vector<8x128xf32>
    %100 = arith.addf %98, %99 : vector<8x128xf32>
    %101 = arith.mulf %100, %21 : vector<8x128xf32>
    %102 = arith.negf %101 : vector<8x128xf32>
    %103 = math.exp %102 : vector<8x128xf32>
    %cst_33 = arith.constant 1.000000e+00 : f32
    %104 = vector.broadcast %cst_33 : f32 to vector<8x128xf32>
    %105 = arith.addf %104, %103 : vector<8x128xf32>
    %106 = arith.divf %104, %105 : vector<8x128xf32>
    %107 = arith.mulf %106, %21 : vector<8x128xf32>
    %108 = arith.subf %107, %23 : vector<8x128xf32>
    %109 = vector.extract_strided_slice %108 {offsets = [0, 0], sizes = [8, 32], strides = [1, 1]} : vector<8x128xf32> to vector<8x32xf32>
    %110 = vector.extract_strided_slice %108 {offsets = [0, 32], sizes = [8, 32], strides = [1, 1]} : vector<8x128xf32> to vector<8x32xf32>
    %111 = vector.extract_strided_slice %108 {offsets = [0, 64], sizes = [8, 32], strides = [1, 1]} : vector<8x128xf32> to vector<8x32xf32>
    %112 = vector.extract_strided_slice %108 {offsets = [0, 96], sizes = [8, 32], strides = [1, 1]} : vector<8x128xf32> to vector<8x32xf32>
    %113 = arith.mulf %110, %92 : vector<8x32xf32>
    %114 = arith.mulf %109, %111 : vector<8x32xf32>
    %115 = arith.addf %113, %114 : vector<8x32xf32>
    %116 = math.tanh %115 : vector<8x32xf32>
    %117 = arith.mulf %112, %116 : vector<8x32xf32>
    %c4_i32 = arith.constant 4 : i32
    %c8_i32_34 = arith.constant 8 : i32
    %118 = arith.muli %c4_i32, %c8_i32_34 : i32
    %119 = tpu.assume_multiple %118, 8 : i32
    %120 = arith.index_cast %119 : i32 to index
    %c0_35 = arith.constant 0 : index
    %121 = vector.load %arg8[%120, %c0_35] : memref<64x128xf32, #tpu.memory_space<vmem>>, vector<8x128xf32>
    %cst_36 = arith.constant dense<0.000000e+00> : vector<8x128xf32>
    %122 = tpu.matmul %117, %12, %cst_36 {dimension_numbers = #tpu.dot_dimension_numbers<[1], [0], [0], [1], [0, 0, 1, 1], [], []>} : vector<8x32xf32>, vector<32x128xf32>, vector<8x128xf32> -> vector<8x128xf32>
    %123 = arith.addf %121, %122 : vector<8x128xf32>
    %124 = arith.mulf %123, %21 : vector<8x128xf32>
    %125 = arith.negf %124 : vector<8x128xf32>
    %126 = math.exp %125 : vector<8x128xf32>
    %cst_37 = arith.constant 1.000000e+00 : f32
    %127 = vector.broadcast %cst_37 : f32 to vector<8x128xf32>
    %128 = arith.addf %127, %126 : vector<8x128xf32>
    %129 = arith.divf %127, %128 : vector<8x128xf32>
    %130 = arith.mulf %129, %21 : vector<8x128xf32>
    %131 = arith.subf %130, %23 : vector<8x128xf32>
    %132 = vector.extract_strided_slice %131 {offsets = [0, 0], sizes = [8, 32], strides = [1, 1]} : vector<8x128xf32> to vector<8x32xf32>
    %133 = vector.extract_strided_slice %131 {offsets = [0, 32], sizes = [8, 32], strides = [1, 1]} : vector<8x128xf32> to vector<8x32xf32>
    %134 = vector.extract_strided_slice %131 {offsets = [0, 64], sizes = [8, 32], strides = [1, 1]} : vector<8x128xf32> to vector<8x32xf32>
    %135 = vector.extract_strided_slice %131 {offsets = [0, 96], sizes = [8, 32], strides = [1, 1]} : vector<8x128xf32> to vector<8x32xf32>
    %136 = arith.mulf %133, %115 : vector<8x32xf32>
    %137 = arith.mulf %132, %134 : vector<8x32xf32>
    %138 = arith.addf %136, %137 : vector<8x32xf32>
    %139 = math.tanh %138 : vector<8x32xf32>
    %140 = arith.mulf %135, %139 : vector<8x32xf32>
    %c5_i32 = arith.constant 5 : i32
    %c8_i32_38 = arith.constant 8 : i32
    %141 = arith.muli %c5_i32, %c8_i32_38 : i32
    %142 = tpu.assume_multiple %141, 8 : i32
    %143 = arith.index_cast %142 : i32 to index
    %c0_39 = arith.constant 0 : index
    %144 = vector.load %arg8[%143, %c0_39] : memref<64x128xf32, #tpu.memory_space<vmem>>, vector<8x128xf32>
    %cst_40 = arith.constant dense<0.000000e+00> : vector<8x128xf32>
    %145 = tpu.matmul %140, %12, %cst_40 {dimension_numbers = #tpu.dot_dimension_numbers<[1], [0], [0], [1], [0, 0, 1, 1], [], []>} : vector<8x32xf32>, vector<32x128xf32>, vector<8x128xf32> -> vector<8x128xf32>
    %146 = arith.addf %144, %145 : vector<8x128xf32>
    %147 = arith.mulf %146, %21 : vector<8x128xf32>
    %148 = arith.negf %147 : vector<8x128xf32>
    %149 = math.exp %148 : vector<8x128xf32>
    %cst_41 = arith.constant 1.000000e+00 : f32
    %150 = vector.broadcast %cst_41 : f32 to vector<8x128xf32>
    %151 = arith.addf %150, %149 : vector<8x128xf32>
    %152 = arith.divf %150, %151 : vector<8x128xf32>
    %153 = arith.mulf %152, %21 : vector<8x128xf32>
    %154 = arith.subf %153, %23 : vector<8x128xf32>
    %155 = vector.extract_strided_slice %154 {offsets = [0, 0], sizes = [8, 32], strides = [1, 1]} : vector<8x128xf32> to vector<8x32xf32>
    %156 = vector.extract_strided_slice %154 {offsets = [0, 32], sizes = [8, 32], strides = [1, 1]} : vector<8x128xf32> to vector<8x32xf32>
    %157 = vector.extract_strided_slice %154 {offsets = [0, 64], sizes = [8, 32], strides = [1, 1]} : vector<8x128xf32> to vector<8x32xf32>
    %158 = vector.extract_strided_slice %154 {offsets = [0, 96], sizes = [8, 32], strides = [1, 1]} : vector<8x128xf32> to vector<8x32xf32>
    %159 = arith.mulf %156, %138 : vector<8x32xf32>
    %160 = arith.mulf %155, %157 : vector<8x32xf32>
    %161 = arith.addf %159, %160 : vector<8x32xf32>
    %162 = math.tanh %161 : vector<8x32xf32>
    %163 = arith.mulf %158, %162 : vector<8x32xf32>
    %c6_i32 = arith.constant 6 : i32
    %c8_i32_42 = arith.constant 8 : i32
    %164 = arith.muli %c6_i32, %c8_i32_42 : i32
    %165 = tpu.assume_multiple %164, 8 : i32
    %166 = arith.index_cast %165 : i32 to index
    %c0_43 = arith.constant 0 : index
    %167 = vector.load %arg8[%166, %c0_43] : memref<64x128xf32, #tpu.memory_space<vmem>>, vector<8x128xf32>
    %cst_44 = arith.constant dense<0.000000e+00> : vector<8x128xf32>
    %168 = tpu.matmul %163, %12, %cst_44 {dimension_numbers = #tpu.dot_dimension_numbers<[1], [0], [0], [1], [0, 0, 1, 1], [], []>} : vector<8x32xf32>, vector<32x128xf32>, vector<8x128xf32> -> vector<8x128xf32>
    %169 = arith.addf %167, %168 : vector<8x128xf32>
    %170 = arith.mulf %169, %21 : vector<8x128xf32>
    %171 = arith.negf %170 : vector<8x128xf32>
    %172 = math.exp %171 : vector<8x128xf32>
    %cst_45 = arith.constant 1.000000e+00 : f32
    %173 = vector.broadcast %cst_45 : f32 to vector<8x128xf32>
    %174 = arith.addf %173, %172 : vector<8x128xf32>
    %175 = arith.divf %173, %174 : vector<8x128xf32>
    %176 = arith.mulf %175, %21 : vector<8x128xf32>
    %177 = arith.subf %176, %23 : vector<8x128xf32>
    %178 = vector.extract_strided_slice %177 {offsets = [0, 0], sizes = [8, 32], strides = [1, 1]} : vector<8x128xf32> to vector<8x32xf32>
    %179 = vector.extract_strided_slice %177 {offsets = [0, 32], sizes = [8, 32], strides = [1, 1]} : vector<8x128xf32> to vector<8x32xf32>
    %180 = vector.extract_strided_slice %177 {offsets = [0, 64], sizes = [8, 32], strides = [1, 1]} : vector<8x128xf32> to vector<8x32xf32>
    %181 = vector.extract_strided_slice %177 {offsets = [0, 96], sizes = [8, 32], strides = [1, 1]} : vector<8x128xf32> to vector<8x32xf32>
    %182 = arith.mulf %179, %161 : vector<8x32xf32>
    %183 = arith.mulf %178, %180 : vector<8x32xf32>
    %184 = arith.addf %182, %183 : vector<8x32xf32>
    %185 = math.tanh %184 : vector<8x32xf32>
    %186 = arith.mulf %181, %185 : vector<8x32xf32>
    %c7_i32 = arith.constant 7 : i32
    %c8_i32_46 = arith.constant 8 : i32
    %187 = arith.muli %c7_i32, %c8_i32_46 : i32
    %188 = tpu.assume_multiple %187, 8 : i32
    %189 = arith.index_cast %188 : i32 to index
    %c0_47 = arith.constant 0 : index
    %190 = vector.load %arg8[%189, %c0_47] : memref<64x128xf32, #tpu.memory_space<vmem>>, vector<8x128xf32>
    %cst_48 = arith.constant dense<0.000000e+00> : vector<8x128xf32>
    %191 = tpu.matmul %186, %12, %cst_48 {dimension_numbers = #tpu.dot_dimension_numbers<[1], [0], [0], [1], [0, 0, 1, 1], [], []>} : vector<8x32xf32>, vector<32x128xf32>, vector<8x128xf32> -> vector<8x128xf32>
    %192 = arith.addf %190, %191 : vector<8x128xf32>
    %193 = arith.mulf %192, %21 : vector<8x128xf32>
    %194 = arith.negf %193 : vector<8x128xf32>
    %195 = math.exp %194 : vector<8x128xf32>
    %cst_49 = arith.constant 1.000000e+00 : f32
    %196 = vector.broadcast %cst_49 : f32 to vector<8x128xf32>
    %197 = arith.addf %196, %195 : vector<8x128xf32>
    %198 = arith.divf %196, %197 : vector<8x128xf32>
    %199 = arith.mulf %198, %21 : vector<8x128xf32>
    %200 = arith.subf %199, %23 : vector<8x128xf32>
    %201 = vector.extract_strided_slice %200 {offsets = [0, 0], sizes = [8, 32], strides = [1, 1]} : vector<8x128xf32> to vector<8x32xf32>
    %202 = vector.extract_strided_slice %200 {offsets = [0, 32], sizes = [8, 32], strides = [1, 1]} : vector<8x128xf32> to vector<8x32xf32>
    %203 = vector.extract_strided_slice %200 {offsets = [0, 64], sizes = [8, 32], strides = [1, 1]} : vector<8x128xf32> to vector<8x32xf32>
    %204 = vector.extract_strided_slice %200 {offsets = [0, 96], sizes = [8, 32], strides = [1, 1]} : vector<8x128xf32> to vector<8x32xf32>
    %205 = arith.mulf %202, %184 : vector<8x32xf32>
    %206 = arith.mulf %201, %203 : vector<8x32xf32>
    %207 = arith.addf %205, %206 : vector<8x32xf32>
    %208 = math.tanh %207 : vector<8x32xf32>
    %209 = arith.mulf %204, %208 : vector<8x32xf32>
    %c8_i32_50 = arith.constant 8 : i32
    %c0_51 = arith.constant 0 : index
    %c0_52 = arith.constant 0 : index
    %c0_53 = arith.constant 0 : index
    %210 = vector.load %arg7[%c0_51, %c0_52, %c0_53] : memref<1x8x32xf32, #tpu.memory_space<vmem>>, vector<1x8x32xf32>
    %211 = vector.shape_cast %210 : vector<1x8x32xf32> to vector<8x32xf32>
    %212 = vector.shape_cast %209 : vector<8x32xf32> to vector<1x8x32xf32>
    tpu.vector_store %arg7[%c0_51, %c0_52, %c0_53], %212 {strides = array<i32>} : memref<1x8x32xf32, #tpu.memory_space<vmem>>, vector<1x8x32xf32>,
    return
  }
  func.func @transform_0(%arg0: i32) -> (i32, i32) {
    %c0_i32 = arith.constant 0 : i32
    %c0_i32_0 = arith.constant 0 : i32
    %c0_i32_1 = arith.constant 0 : i32
    return %c0_i32, %c0_i32_0 : i32, i32
  }
  func.func @transform_1(%arg0: i32) -> (i32, i32) {
    %c0_i32 = arith.constant 0 : i32
    %c0_i32_0 = arith.constant 0 : i32
    %c0_i32_1 = arith.constant 0 : i32
    return %c0_i32, %c0_i32_0 : i32, i32
  }
  func.func @transform_2(%arg0: i32) -> (i32, i32) {
    %c0_i32 = arith.constant 0 : i32
    %c0_i32_0 = arith.constant 0 : i32
    %c0_i32_1 = arith.constant 0 : i32
    return %c0_i32, %c0_i32_0 : i32, i32
  }
  func.func @transform_3(%arg0: i32) -> (i32, i32) {
    %c0_i32 = arith.constant 0 : i32
    %c0_i32_0 = arith.constant 0 : i32
    %c0_i32_1 = arith.constant 0 : i32
    return %c0_i32, %c0_i32_0 : i32, i32
  }
  func.func @transform_4(%arg0: i32) -> (i32, i32) {
    %c0_i32 = arith.constant 0 : i32
    %c0_i32_0 = arith.constant 0 : i32
    %c0_i32_1 = arith.constant 0 : i32
    return %c0_i32, %c0_i32_0 : i32, i32
  }
  func.func @transform_5(%arg0: i32) -> (i32, i32) {
    %c0_i32 = arith.constant 0 : i32
    %c0_i32_0 = arith.constant 0 : i32
    %c0_i32_1 = arith.constant 0 : i32
    return %c0_i32, %c0_i32_0 : i32, i32
  }
  func.func @transform_6(%arg0: i32) -> (i32, i32, i32) {
    %c0_i32 = arith.constant 0 : i32
    %c0_i32_0 = arith.constant 0 : i32
    %c0_i32_1 = arith.constant 0 : i32
    %c0_i32_2 = arith.constant 0 : i32
    return %c0_i32, %c0_i32_0, %c0_i32_1 : i32, i32, i32
  }
}

</mosaic_0001>

<llo_original>
// kernel: tpu_custom_call.1
$region0: #{tpu_custom_call.1}
  #allocation0 [shape = 'u32[]', space=smem, size = 0x4, offset = 0x4, fixed_abs, tag = 'smem constant byte address 0x4 - core index']
  #allocation1 [shape = 'u32[144,128]{1,0:T(1,128)}', space=vmem, size = 0x12000, scoped, tag = 'internal scratch']
  #allocation2 [shape = 'f32[64,128]{1,0:T(8,128)}', space=vmem, size = 0x8000, scoped, tag = 'scratch operand']
  %s0 = inlined_call_operand.vmem [shape: f32[64,4], index: 0, kind: input, shape index: {}]
  %s1 = inlined_call_operand.vmem [shape: f32[4,32], index: 1, kind: input, shape index: {}]
  %s2 = inlined_call_operand.vmem [shape: f32[1,32], index: 2, kind: input, shape index: {}]
  %s3 = inlined_call_operand.vmem [shape: f32[32,128], index: 3, kind: input, shape index: {}]
  %s4 = inlined_call_operand.vmem [shape: f32[32,128], index: 4, kind: input, shape index: {}]
  %s5 = inlined_call_operand.vmem [shape: f32[1,128], index: 5, kind: input, shape index: {}]
  %s6 = inlined_call_operand.hbm [shape: f32[1,8,32], index: 6, kind: output, shape index: {}]
  %s7 = sld [smem:[#allocation0]]
  $region34: #{tpu_custom_call.1} parent=0
    _
  %s9 = ssub.s32 1, %s7
  %s10 = scalar_select 0, %s9, %s7
  $region1: #{tpu_custom_call.1} parent=0
    #allocation3 [shape = 'u8[4096]{0}', space=vmem, size = 0x1000, scoped, tag = 'output window, operand 0, single buffered']
    #allocation4 [shape = 's32[1]{0}', space=sflag, size = 0x4, scoped, tag = 'scoped memory for tpu_custom_call.1']
    %11 = vsyncpa [#allocation4], 0
    // Predicated region
    $region2: #{tpu_custom_call.1} parent=1 // pred_check
      _
    $region3: #{tpu_custom_call.1} parent=1 // pred_check_branch
      %13 = sbr.rel (0) target = $region5
    $region4: #{tpu_custom_call.1} parent=1 // pred_region
      _
    $region5: #{tpu_custom_call.1} parent=1 // pred_fallthru
      _
    // Predicated region
    $region6: #{tpu_custom_call.1} parent=1 // pred_check
      _
    $region7: #{tpu_custom_call.1} parent=1 // pred_check_branch
      %15 = sbr.rel (0) target = $region9
    $region8: #{tpu_custom_call.1} parent=1 // pred_region
      _
    $region9: #{tpu_custom_call.1} parent=1 // pred_fallthru
      _
    // Predicated region
    $region10: #{tpu_custom_call.1} parent=1 // pred_check
      _
    $region11: #{tpu_custom_call.1} parent=1 // pred_check_branch
      %17 = sbr.rel (0) target = $region13
    $region12: #{tpu_custom_call.1} parent=1 // pred_region
      _
    $region13: #{tpu_custom_call.1} parent=1 // pred_fallthru
      _
    // Predicated region
    $region14: #{tpu_custom_call.1} parent=1 // pred_check
      _
    $region15: #{tpu_custom_call.1} parent=1 // pred_check_branch
      %19 = sbr.rel (0) target = $region17
    $region16: #{tpu_custom_call.1} parent=1 // pred_region
      _
    $region17: #{tpu_custom_call.1} parent=1 // pred_fallthru
      _
    // Predicated region
    $region18: #{tpu_custom_call.1} parent=1 // pred_check
      _
    $region19: #{tpu_custom_call.1} parent=1 // pred_check_branch
      %21 = sbr.rel (0) target = $region21
    $region20: #{tpu_custom_call.1} parent=1 // pred_region
      _
    $region21: #{tpu_custom_call.1} parent=1 // pred_fallthru
      _
    // Predicated region
    $region22: #{tpu_custom_call.1} parent=1 // pred_check
      _
    $region23: #{tpu_custom_call.1} parent=1 // pred_check_branch
      %23 = sbr.rel (0) target = $region25
    $region24: #{tpu_custom_call.1} parent=1 // pred_region
      _
    $region25: #{tpu_custom_call.1} parent=1 // pred_fallthru
      _
    %v24 = vld [vmem:[%s0] sm:$0xff]
    %v25 = vld [vmem:[%s0 + $0x8] sm:$0xff]
    %v26 = vld [vmem:[%s0 + $0x10] sm:$0xff]
    %v27 = vld [vmem:[%s0 + $0x18] sm:$0xff]
    %v28 = vld [vmem:[%s0 + $0x20] sm:$0xff]
    %v29 = vld [vmem:[%s0 + $0x28] sm:$0xff]
    %v30 = vld [vmem:[%s0 + $0x30] sm:$0xff]
    %v31 = vld [vmem:[%s0 + $0x38] sm:$0xff]
    %v32 = vld [vmem:[%s1] sm:$0xf]
    %v33 = vld [vmem:[%s2] sm:$0x1]
    %v35 = vlaneseq
    %v36 = vshrl.u32 %v35, 7
    %v37 = vsub.s32 0, %v36
    %v38 = vrot.slane %v33, %v37
    %vm40 = vcmask 31744
    %v42 = vsel %vm40, %v24, 0
    %v45 = vsel %vm40, %v25, 0
    %v48 = vsel %vm40, %v26, 0
    %v51 = vsel %vm40, %v27, 0
    %v54 = vsel %vm40, %v28, 0
    %v57 = vsel %vm40, %v29, 0
    %v60 = vsel %vm40, %v30, 0
    %v63 = vsel %vm40, %v31, 0
    %vm65 = vcmask 1043456
    %v67 = vsel %vm65, %v32, 0
    %69 = vmatprep.subr.mxu0 0.0
    %70 = vmatpush1.msra.mxu0 %v67
    %71 = vmatprep.subr.mxu0 0.0
    %72 = vmatpush1.msra.mxu0 0.0
    %73 = vmatprep.subr.mxu0 0.0
    %74 = vmatpush1.msra.mxu0 0.0
    %75 = vmatprep.subr.mxu0 0.0
    %76 = vmatpush1.msra.mxu0 0.0
    %77 = vmatprep.subr.mxu0 0.0
    %78 = vmatpush1.msra.mxu0 0.0
    %79 = vmatprep.subr.mxu0 0.0
    %80 = vmatpush1.msra.mxu0 0.0
    %81 = vmatprep.subr.mxu0 0.0
    %82 = vmatpush1.msra.mxu0 0.0
    %83 = vmatprep.subr.mxu0 0.0
    %84 = vmatpush1.msra.mxu0 0.0
    %85 = vmatprep.subr.mxu0 0.0
    %86 = vmatpush1.msra.mxu0 0.0
    %87 = vmatprep.subr.mxu0 0.0
    %88 = vmatpush1.msra.mxu0 0.0
    %89 = vmatprep.subr.mxu0 0.0
    %90 = vmatpush1.msra.mxu0 0.0
    %91 = vmatprep.subr.mxu0 0.0
    %92 = vmatpush1.msra.mxu0 0.0
    %93 = vmatprep.subr.mxu0 0.0
    %94 = vmatpush1.msra.mxu0 0.0
    %95 = vmatprep.subr.mxu0 0.0
    %96 = vmatpush1.msra.mxu0 0.0
    %97 = vmatprep.subr.mxu0 0.0
    %98 = vmatpush1.msra.mxu0 0.0
    %99 = vmatprep.subr.mxu0 0.0
    %100 = vmatpush1.msra.mxu0 0.0
    %101 = vmatprep.subr.mxu0 0.0
    %102 = vmatpush1.msra.mxu0 0.0
    %103 = vmatprep.subr.mxu0 0.0
    %104 = vmatpush1.msra.mxu0 0.0
    %105 = vmatprep.subr.mxu0 0.0
    %106 = vmatpush1.msra.mxu0 0.0
    %107 = vmatprep.subr.mxu0 0.0
    %108 = vmatpush1.msra.mxu0 0.0
    %109 = vmatprep.subr.mxu0 0.0
    %110 = vmatpush1.msra.mxu0 0.0
    %111 = vmatprep.subr.mxu0 0.0
    %112 = vmatpush1.msra.mxu0 0.0
    %113 = vmatprep.subr.mxu0 0.0
    %114 = vmatpush1.msra.mxu0 0.0
    %115 = vmatprep.subr.mxu0 0.0
    %116 = vmatpush1.msra.mxu0 0.0
    %117 = vmatprep.subr.mxu0 0.0
    %118 = vmatpush1.msra.mxu0 0.0
    %119 = vmatprep.subr.mxu0 0.0
    %120 = vmatpush1.msra.mxu0 0.0
    %121 = vmatprep.subr.mxu0 0.0
    %122 = vmatpush1.msra.mxu0 0.0
    %123 = vmatprep.subr.mxu0 0.0
    %124 = vmatpush1.msra.mxu0 0.0
    %125 = vmatprep.subr.mxu0 0.0
    %126 = vmatpush1.msra.mxu0 0.0
    %127 = vmatprep.subr.mxu0 0.0
    %128 = vmatpush1.msra.mxu0 0.0
    %129 = vmatprep.subr.mxu0 0.0
    %130 = vmatpush1.msra.mxu0 0.0
    %131 = vmatprep.subr.mxu0 0.0
    %132 = vmatpush1.msra.mxu0 0.0
    %133 = vmatprep.mubr.f32.mxu0 0.0
    %134 = vmatmul.mubr.f32.gmra.mrb[0].mxu0 %v42
    %v135 = vpop.f32.mrb[0].mxu0
    %v136 = vadd.f32 %v38, %v135
    %v137 = vpop.f32.mrb[0].mxu0
    %138 = vmatprep.mubr.f32.mxu0 0.0
    %139 = vmatmul.mubr.f32.gmra.mrb[0].mxu0 %v45
    %v140 = vpop.f32.mrb[0].mxu0
    %v141 = vadd.f32 %v38, %v140
    %v142 = vpop.f32.mrb[0].mxu0
    %143 = vmatprep.mubr.f32.mxu0 0.0
    %144 = vmatmul.mubr.f32.gmra.mrb[0].mxu0 %v48
    %v145 = vpop.f32.mrb[0].mxu0
    %v146 = vadd.f32 %v38, %v145
    %v147 = vpop.f32.mrb[0].mxu0
    %148 = vmatprep.mubr.f32.mxu0 0.0
    %149 = vmatmul.mubr.f32.gmra.mrb[0].mxu0 %v51
    %v150 = vpop.f32.mrb[0].mxu0
    %v151 = vadd.f32 %v38, %v150
    %v152 = vpop.f32.mrb[0].mxu0
    %153 = vmatprep.mubr.f32.mxu0 0.0
    %154 = vmatmul.mubr.f32.gmra.mrb[0].mxu0 %v54
    %v155 = vpop.f32.mrb[0].mxu0
    %v156 = vadd.f32 %v38, %v155
    %v157 = vpop.f32.mrb[0].mxu0
    %158 = vmatprep.mubr.f32.mxu0 0.0
    %159 = vmatmul.mubr.f32.gmra.mrb[0].mxu0 %v57
    %v160 = vpop.f32.mrb[0].mxu0
    %v161 = vadd.f32 %v38, %v160
    %v162 = vpop.f32.mrb[0].mxu0
    %163 = vmatprep.mubr.f32.mxu0 0.0
    %164 = vmatmul.mubr.f32.gmra.mrb[0].mxu0 %v60
    %v165 = vpop.f32.mrb[0].mxu0
    %v166 = vadd.f32 %v38, %v165
    %v167 = vpop.f32.mrb[0].mxu0
    %168 = vmatprep.mubr.f32.mxu0 0.0
    %169 = vmatmul.mubr.f32.gmra.mrb[0].mxu0 %v63
    %v170 = vpop.f32.mrb[0].mxu0
    %v171 = vadd.f32 %v38, %v170
    %v172 = vpop.f32.mrb[0].mxu0
    %173 = vdwg.mxu0
    %v174 = vld [vmem:[%s3] sm:$0xff]
    %v175 = vld [vmem:[%s3 + $0x8] sm:$0xff]
    %v176 = vld [vmem:[%s3 + $0x10] sm:$0xff]
    %v177 = vld [vmem:[%s3 + $0x18] sm:$0xff]
    %v178 = vld [vmem:[%s5] sm:$0x1]
    %v180 = vlaneseq
    %v181 = vshrl.u32 %v180, 7
    %v182 = vsub.s32 0, %v181
    %v183 = vrot.slane %v178, %v182
    %vm185 = vcmask 261120
    %v187 = vsel %vm185, %v136, 0
    %v190 = vsel %vm185, %v141, 0
    %v193 = vsel %vm185, %v146, 0
    %v196 = vsel %vm185, %v151, 0
    %v199 = vsel %vm185, %v156, 0
    %v202 = vsel %vm185, %v161, 0
    %v205 = vsel %vm185, %v166, 0
    %v208 = vsel %vm185, %v171, 0
    %210 = vmatprep.subr.mxu0 0.0
    %211 = vmatpush1.msra.mxu0 %v174
    %212 = vmatprep.subr.mxu0 0.0
    %213 = vmatpush1.msra.mxu0 %v175
    %214 = vmatprep.subr.mxu0 0.0
    %215 = vmatpush1.msra.mxu0 %v176
    %216 = vmatprep.subr.mxu0 0.0
    %217 = vmatpush1.msra.mxu0 %v177
    %218 = vmatprep.subr.mxu0 0.0
    %219 = vmatpush1.msra.mxu0 0.0
    %220 = vmatprep.subr.mxu0 0.0
    %221 = vmatpush1.msra.mxu0 0.0
    %222 = vmatprep.subr.mxu0 0.0
    %223 = vmatpush1.msra.mxu0 0.0
    %224 = vmatprep.subr.mxu0 0.0
    %225 = vmatpush1.msra.mxu0 0.0
    %226 = vmatprep.subr.mxu0 0.0
    %227 = vmatpush1.msra.mxu0 0.0
    %228 = vmatprep.subr.mxu0 0.0
    %229 = vmatpush1.msra.mxu0 0.0
    %230 = vmatprep.subr.mxu0 0.0
    %231 = vmatpush1.msra.mxu0 0.0
    %232 = vmatprep.subr.mxu0 0.0
    %233 = vmatpush1.msra.mxu0 0.0
    %234 = vmatprep.subr.mxu0 0.0
    %235 = vmatpush1.msra.mxu0 0.0
    %236 = vmatprep.subr.mxu0 0.0
    %237 = vmatpush1.msra.mxu0 0.0
    %238 = vmatprep.subr.mxu0 0.0
    %239 = vmatpush1.msra.mxu0 0.0
    %240 = vmatprep.subr.mxu0 0.0
    %241 = vmatpush1.msra.mxu0 0.0
    %242 = vmatprep.subr.mxu0 0.0
    %243 = vmatpush1.msra.mxu0 0.0
    %244 = vmatprep.subr.mxu0 0.0
    %245 = vmatpush1.msra.mxu0 0.0
    %246 = vmatprep.subr.mxu0 0.0
    %247 = vmatpush1.msra.mxu0 0.0
    %248 = vmatprep.subr.mxu0 0.0
    %249 = vmatpush1.msra.mxu0 0.0
    %250 = vmatprep.subr.mxu0 0.0
    %251 = vmatpush1.msra.mxu0 0.0
    %252 = vmatprep.subr.mxu0 0.0
    %253 = vmatpush1.msra.mxu0 0.0
    %254 = vmatprep.subr.mxu0 0.0
    %255 = vmatpush1.msra.mxu0 0.0
    %256 = vmatprep.subr.mxu0 0.0
    %257 = vmatpush1.msra.mxu0 0.0
    %258 = vmatprep.subr.mxu0 0.0
    %259 = vmatpush1.msra.mxu0 0.0
    %260 = vmatprep.subr.mxu0 0.0
    %261 = vmatpush1.msra.mxu0 0.0
    %262 = vmatprep.subr.mxu0 0.0
    %263 = vmatpush1.msra.mxu0 0.0
    %264 = vmatprep.subr.mxu0 0.0
    %265 = vmatpush1.msra.mxu0 0.0
    %266 = vmatprep.subr.mxu0 0.0
    %267 = vmatpush1.msra.mxu0 0.0
    %268 = vmatprep.subr.mxu0 0.0
    %269 = vmatpush1.msra.mxu0 0.0
    %270 = vmatprep.subr.mxu0 0.0
    %271 = vmatpush1.msra.mxu0 0.0
    %272 = vmatprep.subr.mxu0 0.0
    %273 = vmatpush1.msra.mxu0 0.0
    %274 = vmatprep.mubr.f32.mxu0 0.0
    %275 = vmatmul.mubr.f32.gmra.mrb[0].mxu0 %v187
    %v276 = vpop.f32.mrb[0].mxu0
    %v277 = vadd.f32 %v183, %v276
    %v278 = vpop.f32.mrb[0].mxu0
    %279 = vmatprep.mubr.f32.mxu0 0.0
    %280 = vmatmul.mubr.f32.gmra.mrb[0].mxu0 %v190
    %v281 = vpop.f32.mrb[0].mxu0
    %v282 = vadd.f32 %v183, %v281
    %v283 = vpop.f32.mrb[0].mxu0
    %284 = vmatprep.mubr.f32.mxu0 0.0
    %285 = vmatmul.mubr.f32.gmra.mrb[0].mxu0 %v193
    %v286 = vpop.f32.mrb[0].mxu0
    %v287 = vadd.f32 %v183, %v286
    %v288 = vpop.f32.mrb[0].mxu0
    %289 = vmatprep.mubr.f32.mxu0 0.0
    %290 = vmatmul.mubr.f32.gmra.mrb[0].mxu0 %v196
    %v291 = vpop.f32.mrb[0].mxu0
    %v292 = vadd.f32 %v183, %v291
    %v293 = vpop.f32.mrb[0].mxu0
    %294 = vmatprep.mubr.f32.mxu0 0.0
    %295 = vmatmul.mubr.f32.gmra.mrb[0].mxu0 %v199
    %v296 = vpop.f32.mrb[0].mxu0
    %v297 = vadd.f32 %v183, %v296
    %v298 = vpop.f32.mrb[0].mxu0
    %299 = vmatprep.mubr.f32.mxu0 0.0
    %300 = vmatmul.mubr.f32.gmra.mrb[0].mxu0 %v202
    %v301 = vpop.f32.mrb[0].mxu0
    %v302 = vadd.f32 %v183, %v301
    %v303 = vpop.f32.mrb[0].mxu0
    %304 = vmatprep.mubr.f32.mxu0 0.0
    %305 = vmatmul.mubr.f32.gmra.mrb[0].mxu0 %v205
    %v306 = vpop.f32.mrb[0].mxu0
    %v307 = vadd.f32 %v183, %v306
    %v308 = vpop.f32.mrb[0].mxu0
    %309 = vmatprep.mubr.f32.mxu0 0.0
    %310 = vmatmul.mubr.f32.gmra.mrb[0].mxu0 %v208
    %v311 = vpop.f32.mrb[0].mxu0
    %v312 = vadd.f32 %v183, %v311
    %v313 = vpop.f32.mrb[0].mxu0
    %314 = vdwg.mxu0
    %315 = vst [vmem:[#allocation2] sm:$0xff] %v277
    %316 = vst [vmem:[#allocation2 + $0x8] sm:$0xff] %v282
    %317 = vst [vmem:[#allocation2 + $0x10] sm:$0xff] %v287
    %318 = vst [vmem:[#allocation2 + $0x18] sm:$0xff] %v292
    %319 = vst [vmem:[#allocation2 + $0x20] sm:$0xff] %v297
    %320 = vst [vmem:[#allocation2 + $0x28] sm:$0xff] %v302
    %321 = vst [vmem:[#allocation2 + $0x30] sm:$0xff] %v307
    %322 = vst [vmem:[#allocation2 + $0x38] sm:$0xff] %v312
    %v323 = vld [vmem:[%s4] sm:$0xff]
    %v324 = vld [vmem:[%s4 + $0x8] sm:$0xff]
    %v325 = vld [vmem:[%s4 + $0x10] sm:$0xff]
    %v326 = vld [vmem:[%s4 + $0x18] sm:$0xff]
    %v327 = vlaneseq
    %v328 = vand.u32 %v327, 127
    %vm329 = vcmp.ge.s32.totalorder %v328, 64
    %vm330 = vcmp.lt.s32.totalorder %v328, 96
    %vm331 = vmand %vm329, %vm330
    %v332 = vsel %vm331, 2.0, 1.0
    %v333 = vsub.f32 %v332, 1.0
    %v334 = vld [vmem:[#allocation2] sm:$0xff]
    %v336 = vsel %vm185, 0.0, 0
    %338 = vmatprep.subr.mxu0 0.0
    %339 = vmatpush1.msra.mxu0 %v323
    %340 = vmatprep.subr.mxu0 0.0
    %341 = vmatpush1.msra.mxu0 %v324
    %342 = vmatprep.subr.mxu0 0.0
    %343 = vmatpush1.msra.mxu0 %v325
    %344 = vmatprep.subr.mxu0 0.0
    %345 = vmatpush1.msra.mxu0 %v326
    %346 = vmatprep.subr.mxu0 0.0
    %347 = vmatpush1.msra.mxu0 0.0
    %348 = vmatprep.subr.mxu0 0.0
    %349 = vmatpush1.msra.mxu0 0.0
    %350 = vmatprep.subr.mxu0 0.0
    %351 = vmatpush1.msra.mxu0 0.0
    %352 = vmatprep.subr.mxu0 0.0
    %353 = vmatpush1.msra.mxu0 0.0
    %354 = vmatprep.subr.mxu0 0.0
    %355 = vmatpush1.msra.mxu0 0.0
    %356 = vmatprep.subr.mxu0 0.0
    %357 = vmatpush1.msra.mxu0 0.0
    %358 = vmatprep.subr.mxu0 0.0
    %359 = vmatpush1.msra.mxu0 0.0
    %360 = vmatprep.subr.mxu0 0.0
    %361 = vmatpush1.msra.mxu0 0.0
    %362 = vmatprep.subr.mxu0 0.0
    %363 = vmatpush1.msra.mxu0 0.0
    %364 = vmatprep.subr.mxu0 0.0
    %365 = vmatpush1.msra.mxu0 0.0
    %366 = vmatprep.subr.mxu0 0.0
    %367 = vmatpush1.msra.mxu0 0.0
    %368 = vmatprep.subr.mxu0 0.0
    %369 = vmatpush1.msra.mxu0 0.0
    %370 = vmatprep.subr.mxu0 0.0
    %371 = vmatpush1.msra.mxu0 0.0
    %372 = vmatprep.subr.mxu0 0.0
    %373 = vmatpush1.msra.mxu0 0.0
    %374 = vmatprep.subr.mxu0 0.0
    %375 = vmatpush1.msra.mxu0 0.0
    %376 = vmatprep.subr.mxu0 0.0
    %377 = vmatpush1.msra.mxu0 0.0
    %378 = vmatprep.subr.mxu0 0.0
    %379 = vmatpush1.msra.mxu0 0.0
    %380 = vmatprep.subr.mxu0 0.0
    %381 = vmatpush1.msra.mxu0 0.0
    %382 = vmatprep.subr.mxu0 0.0
    %383 = vmatpush1.msra.mxu0 0.0
    %384 = vmatprep.subr.mxu0 0.0
    %385 = vmatpush1.msra.mxu0 0.0
    %386 = vmatprep.subr.mxu0 0.0
    %387 = vmatpush1.msra.mxu0 0.0
    %388 = vmatprep.subr.mxu0 0.0
    %389 = vmatpush1.msra.mxu0 0.0
    %390 = vmatprep.subr.mxu0 0.0
    %391 = vmatpush1.msra.mxu0 0.0
    %392 = vmatprep.subr.mxu0 0.0
    %393 = vmatpush1.msra.mxu0 0.0
    %394 = vmatprep.subr.mxu0 0.0
    %395 = vmatpush1.msra.mxu0 0.0
    %396 = vmatprep.subr.mxu0 0.0
    %397 = vmatpush1.msra.mxu0 0.0
    %398 = vmatprep.subr.mxu0 0.0
    %399 = vmatpush1.msra.mxu0 0.0
    %400 = vmatprep.subr.mxu0 0.0
    %401 = vmatpush1.msra.mxu0 0.0
    %402 = vmatprep.mubr.f32.mxu0 0.0
    %403 = vmatmul.mubr.f32.gmra.mrb[0].mxu0 %v336
    %v404 = vpop.f32.mrb[0].mxu0
    %v405 = vadd.f32 0.0, %v404
    %v406 = vpop.f32.mrb[0].mxu0
    %407 = vdwg.mxu0
    %v408 = vadd.f32 %v334, %v405
    %v409 = vmul.f32 %v408, %v332
    %v410 = vxor.u32 %v409, 2147483648
    %v411 = vmul.f32 %v410, 1.442695
    %v412 = vpow.pop %v411
    %v413 = vadd.f32 %v412, 1.0
    %v414 = vrcp.pop %v413
    %v415 = vmul.f32 1.0, %v414
    %v416 = vmul.f32 %v415, %v332
    %v417 = vsub.f32 %v416, %v333
    %v418 = vmul.f32 %v417, 0.0
    %420 = vrot.lane.b32.xlu0 %v417, 64
    %v421 = vpop.permute.xlu0 %420
    %v423 = vmul.f32 %v417, %v421
    %425 = vrot.lane.b32.xlu0 %v423, 32
    %v426 = vpop.permute.xlu0 %425
    %v428 = vadd.f32 %v418, %v426
    %v429 = vtanh.pop %v428
    %431 = vrot.lane.b32.xlu0 %v429, 64
    %v432 = vpop.permute.xlu0 %431
    %v434 = vmul.f32 %v417, %v432
    %s435 = scalar_lea.vmem [#allocation2], 8
    %v436 = vld [vmem:[%s435] sm:$0xff]
    %438 = vrot.lane.b32.xlu0 %v434, 32
    %v439 = vpop.permute.xlu0 %438
    %v440 = vsel %vm185, %v439, 0
    %442 = vmatprep.subr.mxu0 0.0
    %443 = vmatpush1.msra.mxu0 %v323
    %444 = vmatprep.subr.mxu0 0.0
    %445 = vmatpush1.msra.mxu0 %v324
    %446 = vmatprep.subr.mxu0 0.0
    %447 = vmatpush1.msra.mxu0 %v325
    %448 = vmatprep.subr.mxu0 0.0
    %449 = vmatpush1.msra.mxu0 %v326
    %450 = vmatprep.subr.mxu0 0.0
    %451 = vmatpush1.msra.mxu0 0.0
    %452 = vmatprep.subr.mxu0 0.0
    %453 = vmatpush1.msra.mxu0 0.0
    %454 = vmatprep.subr.mxu0 0.0
    %455 = vmatpush1.msra.mxu0 0.0
    %456 = vmatprep.subr.mxu0 0.0
    %457 = vmatpush1.msra.mxu0 0.0
    %458 = vmatprep.subr.mxu0 0.0
    %459 = vmatpush1.msra.mxu0 0.0
    %460 = vmatprep.subr.mxu0 0.0
    %461 = vmatpush1.msra.mxu0 0.0
    %462 = vmatprep.subr.mxu0 0.0
    %463 = vmatpush1.msra.mxu0 0.0
    %464 = vmatprep.subr.mxu0 0.0
    %465 = vmatpush1.msra.mxu0 0.0
    %466 = vmatprep.subr.mxu0 0.0
    %467 = vmatpush1.msra.mxu0 0.0
    %468 = vmatprep.subr.mxu0 0.0
    %469 = vmatpush1.msra.mxu0 0.0
    %470 = vmatprep.subr.mxu0 0.0
    %471 = vmatpush1.msra.mxu0 0.0
    %472 = vmatprep.subr.mxu0 0.0
    %473 = vmatpush1.msra.mxu0 0.0
    %474 = vmatprep.subr.mxu0 0.0
    %475 = vmatpush1.msra.mxu0 0.0
    %476 = vmatprep.subr.mxu0 0.0
    %477 = vmatpush1.msra.mxu0 0.0
    %478 = vmatprep.subr.mxu0 0.0
    %479 = vmatpush1.msra.mxu0 0.0
    %480 = vmatprep.subr.mxu0 0.0
    %481 = vmatpush1.msra.mxu0 0.0
    %482 = vmatprep.subr.mxu0 0.0
    %483 = vmatpush1.msra.mxu0 0.0
    %484 = vmatprep.subr.mxu0 0.0
    %485 = vmatpush1.msra.mxu0 0.0
    %486 = vmatprep.subr.mxu0 0.0
    %487 = vmatpush1.msra.mxu0 0.0
    %488 = vmatprep.subr.mxu0 0.0
    %489 = vmatpush1.msra.mxu0 0.0
    %490 = vmatprep.subr.mxu0 0.0
    %491 = vmatpush1.msra.mxu0 0.0
    %492 = vmatprep.subr.mxu0 0.0
    %493 = vmatpush1.msra.mxu0 0.0
    %494 = vmatprep.subr.mxu0 0.0
    %495 = vmatpush1.msra.mxu0 0.0
    %496 = vmatprep.subr.mxu0 0.0
    %497 = vmatpush1.msra.mxu0 0.0
    %498 = vmatprep.subr.mxu0 0.0
    %499 = vmatpush1.msra.mxu0 0.0
    %500 = vmatprep.subr.mxu0 0.0
    %501 = vmatpush1.msra.mxu0 0.0
    %502 = vmatprep.subr.mxu0 0.0
    %503 = vmatpush1.msra.mxu0 0.0
    %504 = vmatprep.subr.mxu0 0.0
    %505 = vmatpush1.msra.mxu0 0.0
    %506 = vmatprep.mubr.f32.mxu0 0.0
    %507 = vmatmul.mubr.f32.gmra.mrb[0].mxu0 %v440
    %v508 = vpop.f32.mrb[0].mxu0
    %v509 = vadd.f32 0.0, %v508
    %v510 = vpop.f32.mrb[0].mxu0
    %511 = vdwg.mxu0
    %v512 = vadd.f32 %v436, %v509
    %v513 = vmul.f32 %v512, %v332
    %v514 = vxor.u32 %v513, 2147483648
    %v515 = vmul.f32 %v514, 1.442695
    %v516 = vpow.pop %v515
    %v517 = vadd.f32 %v516, 1.0
    %v518 = vrcp.pop %v517
    %v519 = vmul.f32 1.0, %v518
    %v520 = vmul.f32 %v519, %v332
    %v521 = vsub.f32 %v520, %v333
    %v522 = vmul.f32 %v521, %v428
    %524 = vrot.lane.b32.xlu0 %v521, 64
    %v525 = vpop.permute.xlu0 %524
    %v527 = vmul.f32 %v521, %v525
    %529 = vrot.lane.b32.xlu0 %v527, 32
    %v530 = vpop.permute.xlu0 %529
    %v532 = vadd.f32 %v522, %v530
    %v533 = vtanh.pop %v532
    %535 = vrot.lane.b32.xlu0 %v533, 64
    %v536 = vpop.permute.xlu0 %535
    %v538 = vmul.f32 %v521, %v536
    %s539 = scalar_lea.vmem [#allocation2], 16
    %v540 = vld [vmem:[%s539] sm:$0xff]
    %542 = vrot.lane.b32.xlu0 %v538, 32
    %v543 = vpop.permute.xlu0 %542
    %v544 = vsel %vm185, %v543, 0
    %546 = vmatprep.subr.mxu0 0.0
    %547 = vmatpush1.msra.mxu0 %v323
    %548 = vmatprep.subr.mxu0 0.0
    %549 = vmatpush1.msra.mxu0 %v324
    %550 = vmatprep.subr.mxu0 0.0
    %551 = vmatpush1.msra.mxu0 %v325
    %552 = vmatprep.subr.mxu0 0.0
    %553 = vmatpush1.msra.mxu0 %v326
    %554 = vmatprep.subr.mxu0 0.0
    %555 = vmatpush1.msra.mxu0 0.0
    %556 = vmatprep.subr.mxu0 0.0
    %557 = vmatpush1.msra.mxu0 0.0
    %558 = vmatprep.subr.mxu0 0.0
    %559 = vmatpush1.msra.mxu0 0.0
    %560 = vmatprep.subr.mxu0 0.0
    %561 = vmatpush1.msra.mxu0 0.0
    %562 = vmatprep.subr.mxu0 0.0
    %563 = vmatpush1.msra.mxu0 0.0
    %564 = vmatprep.subr.mxu0 0.0
    %565 = vmatpush1.msra.mxu0 0.0
    %566 = vmatprep.subr.mxu0 0.0
    %567 = vmatpush1.msra.mxu0 0.0
    %568 = vmatprep.subr.mxu0 0.0
    %569 = vmatpush1.msra.mxu0 0.0
    %570 = vmatprep.subr.mxu0 0.0
    %571 = vmatpush1.msra.mxu0 0.0
    %572 = vmatprep.subr.mxu0 0.0
    %573 = vmatpush1.msra.mxu0 0.0
    %574 = vmatprep.subr.mxu0 0.0
    %575 = vmatpush1.msra.mxu0 0.0
    %576 = vmatprep.subr.mxu0 0.0
    %577 = vmatpush1.msra.mxu0 0.0
    %578 = vmatprep.subr.mxu0 0.0
    %579 = vmatpush1.msra.mxu0 0.0
    %580 = vmatprep.subr.mxu0 0.0
    %581 = vmatpush1.msra.mxu0 0.0
    %582 = vmatprep.subr.mxu0 0.0
    %583 = vmatpush1.msra.mxu0 0.0
    %584 = vmatprep.subr.mxu0 0.0
    %585 = vmatpush1.msra.mxu0 0.0
    %586 = vmatprep.subr.mxu0 0.0
    %587 = vmatpush1.msra.mxu0 0.0
    %588 = vmatprep.subr.mxu0 0.0
    %589 = vmatpush1.msra.mxu0 0.0
    %590 = vmatprep.subr.mxu0 0.0
    %591 = vmatpush1.msra.mxu0 0.0
    %592 = vmatprep.subr.mxu0 0.0
    %593 = vmatpush1.msra.mxu0 0.0
    %594 = vmatprep.subr.mxu0 0.0
    %595 = vmatpush1.msra.mxu0 0.0
    %596 = vmatprep.subr.mxu0 0.0
    %597 = vmatpush1.msra.mxu0 0.0
    %598 = vmatprep.subr.mxu0 0.0
    %599 = vmatpush1.msra.mxu0 0.0
    %600 = vmatprep.subr.mxu0 0.0
    %601 = vmatpush1.msra.mxu0 0.0
    %602 = vmatprep.subr.mxu0 0.0
    %603 = vmatpush1.msra.mxu0 0.0
    %604 = vmatprep.subr.mxu0 0.0
    %605 = vmatpush1.msra.mxu0 0.0
    %606 = vmatprep.subr.mxu0 0.0
    %607 = vmatpush1.msra.mxu0 0.0
    %608 = vmatprep.subr.mxu0 0.0
    %609 = vmatpush1.msra.mxu0 0.0
    %610 = vmatprep.mubr.f32.mxu0 0.0
    %611 = vmatmul.mubr.f32.gmra.mrb[0].mxu0 %v544
    %v612 = vpop.f32.mrb[0].mxu0
    %v613 = vadd.f32 0.0, %v612
    %v614 = vpop.f32.mrb[0].mxu0
    %615 = vdwg.mxu0
    %v616 = vadd.f32 %v540, %v613
    %v617 = vmul.f32 %v616, %v332
    %v618 = vxor.u32 %v617, 2147483648
    %v619 = vmul.f32 %v618, 1.442695
    %v620 = vpow.pop %v619
    %v621 = vadd.f32 %v620, 1.0
    %v622 = vrcp.pop %v621
    %v623 = vmul.f32 1.0, %v622
    %v624 = vmul.f32 %v623, %v332
    %v625 = vsub.f32 %v624, %v333
    %v626 = vmul.f32 %v625, %v532
    %628 = vrot.lane.b32.xlu0 %v625, 64
    %v629 = vpop.permute.xlu0 %628
    %v631 = vmul.f32 %v625, %v629
    %633 = vrot.lane.b32.xlu0 %v631, 32
    %v634 = vpop.permute.xlu0 %633
    %v636 = vadd.f32 %v626, %v634
    %v637 = vtanh.pop %v636
    %639 = vrot.lane.b32.xlu0 %v637, 64
    %v640 = vpop.permute.xlu0 %639
    %v642 = vmul.f32 %v625, %v640
    %s643 = scalar_lea.vmem [#allocation2], 24
    %v644 = vld [vmem:[%s643] sm:$0xff]
    %646 = vrot.lane.b32.xlu0 %v642, 32
    %v647 = vpop.permute.xlu0 %646
    %v648 = vsel %vm185, %v647, 0
    %650 = vmatprep.subr.mxu0 0.0
    %651 = vmatpush1.msra.mxu0 %v323
    %652 = vmatprep.subr.mxu0 0.0
    %653 = vmatpush1.msra.mxu0 %v324
    %654 = vmatprep.subr.mxu0 0.0
    %655 = vmatpush1.msra.mxu0 %v325
    %656 = vmatprep.subr.mxu0 0.0
    %657 = vmatpush1.msra.mxu0 %v326
    %658 = vmatprep.subr.mxu0 0.0
    %659 = vmatpush1.msra.mxu0 0.0
    %660 = vmatprep.subr.mxu0 0.0
    %661 = vmatpush1.msra.mxu0 0.0
    %662 = vmatprep.subr.mxu0 0.0
    %663 = vmatpush1.msra.mxu0 0.0
    %664 = vmatprep.subr.mxu0 0.0
    %665 = vmatpush1.msra.mxu0 0.0
    %666 = vmatprep.subr.mxu0 0.0
    %667 = vmatpush1.msra.mxu0 0.0
    %668 = vmatprep.subr.mxu0 0.0
    %669 = vmatpush1.msra.mxu0 0.0
    %670 = vmatprep.subr.mxu0 0.0
    %671 = vmatpush1.msra.mxu0 0.0
    %672 = vmatprep.subr.mxu0 0.0
    %673 = vmatpush1.msra.mxu0 0.0
    %674 = vmatprep.subr.mxu0 0.0
    %675 = vmatpush1.msra.mxu0 0.0
    %676 = vmatprep.subr.mxu0 0.0
    %677 = vmatpush1.msra.mxu0 0.0
    %678 = vmatprep.subr.mxu0 0.0
    %679 = vmatpush1.msra.mxu0 0.0
    %680 = vmatprep.subr.mxu0 0.0
    %681 = vmatpush1.msra.mxu0 0.0
    %682 = vmatprep.subr.mxu0 0.0
    %683 = vmatpush1.msra.mxu0 0.0
    %684 = vmatprep.subr.mxu0 0.0
    %685 = vmatpush1.msra.mxu0 0.0
    %686 = vmatprep.subr.mxu0 0.0
    %687 = vmatpush1.msra.mxu0 0.0
    %688 = vmatprep.subr.mxu0 0.0
    %689 = vmatpush1.msra.mxu0 0.0
    %690 = vmatprep.subr.mxu0 0.0
    %691 = vmatpush1.msra.mxu0 0.0
    %692 = vmatprep.subr.mxu0 0.0
    %693 = vmatpush1.msra.mxu0 0.0
    %694 = vmatprep.subr.mxu0 0.0
    %695 = vmatpush1.msra.mxu0 0.0
    %696 = vmatprep.subr.mxu0 0.0
    %697 = vmatpush1.msra.mxu0 0.0
    %698 = vmatprep.subr.mxu0 0.0
    %699 = vmatpush1.msra.mxu0 0.0
    %700 = vmatprep.subr.mxu0 0.0
    %701 = vmatpush1.msra.mxu0 0.0
    %702 = vmatprep.subr.mxu0 0.0
    %703 = vmatpush1.msra.mxu0 0.0
    %704 = vmatprep.subr.mxu0 0.0
    %705 = vmatpush1.msra.mxu0 0.0
    %706 = vmatprep.subr.mxu0 0.0
    %707 = vmatpush1.msra.mxu0 0.0
    %708 = vmatprep.subr.mxu0 0.0
    %709 = vmatpush1.msra.mxu0 0.0
    %710 = vmatprep.subr.mxu0 0.0
    %711 = vmatpush1.msra.mxu0 0.0
    %712 = vmatprep.subr.mxu0 0.0
    %713 = vmatpush1.msra.mxu0 0.0
    %714 = vmatprep.mubr.f32.mxu0 0.0
    %715 = vmatmul.mubr.f32.gmra.mrb[0].mxu0 %v648
    %v716 = vpop.f32.mrb[0].mxu0
    %v717 = vadd.f32 0.0, %v716
    %v718 = vpop.f32.mrb[0].mxu0
    %719 = vdwg.mxu0
    %v720 = vadd.f32 %v644, %v717
    %v721 = vmul.f32 %v720, %v332
    %v722 = vxor.u32 %v721, 2147483648
    %v723 = vmul.f32 %v722, 1.442695
    %v724 = vpow.pop %v723
    %v725 = vadd.f32 %v724, 1.0
    %v726 = vrcp.pop %v725
    %v727 = vmul.f32 1.0, %v726
    %v728 = vmul.f32 %v727, %v332
    %v729 = vsub.f32 %v728, %v333
    %v730 = vmul.f32 %v729, %v636
    %732 = vrot.lane.b32.xlu0 %v729, 64
    %v733 = vpop.permute.xlu0 %732
    %v735 = vmul.f32 %v729, %v733
    %737 = vrot.lane.b32.xlu0 %v735, 32
    %v738 = vpop.permute.xlu0 %737
    %v740 = vadd.f32 %v730, %v738
    %v741 = vtanh.pop %v740
    %743 = vrot.lane.b32.xlu0 %v741, 64
    %v744 = vpop.permute.xlu0 %743
    %v746 = vmul.f32 %v729, %v744
    %s747 = scalar_lea.vmem [#allocation2], 32
    %v748 = vld [vmem:[%s747] sm:$0xff]
    %750 = vrot.lane.b32.xlu0 %v746, 32
    %v751 = vpop.permute.xlu0 %750
    %v752 = vsel %vm185, %v751, 0
    %754 = vmatprep.subr.mxu0 0.0
    %755 = vmatpush1.msra.mxu0 %v323
    %756 = vmatprep.subr.mxu0 0.0
    %757 = vmatpush1.msra.mxu0 %v324
    %758 = vmatprep.subr.mxu0 0.0
    %759 = vmatpush1.msra.mxu0 %v325
    %760 = vmatprep.subr.mxu0 0.0
    %761 = vmatpush1.msra.mxu0 %v326
    %762 = vmatprep.subr.mxu0 0.0
    %763 = vmatpush1.msra.mxu0 0.0
    %764 = vmatprep.subr.mxu0 0.0
    %765 = vmatpush1.msra.mxu0 0.0
    %766 = vmatprep.subr.mxu0 0.0
    %767 = vmatpush1.msra.mxu0 0.0
    %768 = vmatprep.subr.mxu0 0.0
    %769 = vmatpush1.msra.mxu0 0.0
    %770 = vmatprep.subr.mxu0 0.0
    %771 = vmatpush1.msra.mxu0 0.0
    %772 = vmatprep.subr.mxu0 0.0
    %773 = vmatpush1.msra.mxu0 0.0
    %774 = vmatprep.subr.mxu0 0.0
    %775 = vmatpush1.msra.mxu0 0.0
    %776 = vmatprep.subr.mxu0 0.0
    %777 = vmatpush1.msra.mxu0 0.0
    %778 = vmatprep.subr.mxu0 0.0
    %779 = vmatpush1.msra.mxu0 0.0
    %780 = vmatprep.subr.mxu0 0.0
    %781 = vmatpush1.msra.mxu0 0.0
    %782 = vmatprep.subr.mxu0 0.0
    %783 = vmatpush1.msra.mxu0 0.0
    %784 = vmatprep.subr.mxu0 0.0
    %785 = vmatpush1.msra.mxu0 0.0
    %786 = vmatprep.subr.mxu0 0.0
    %787 = vmatpush1.msra.mxu0 0.0
    %788 = vmatprep.subr.mxu0 0.0
    %789 = vmatpush1.msra.mxu0 0.0
    %790 = vmatprep.subr.mxu0 0.0
    %791 = vmatpush1.msra.mxu0 0.0
    %792 = vmatprep.subr.mxu0 0.0
    %793 = vmatpush1.msra.mxu0 0.0
    %794 = vmatprep.subr.mxu0 0.0
    %795 = vmatpush1.msra.mxu0 0.0
    %796 = vmatprep.subr.mxu0 0.0
    %797 = vmatpush1.msra.mxu0 0.0
    %798 = vmatprep.subr.mxu0 0.0
    %799 = vmatpush1.msra.mxu0 0.0
    %800 = vmatprep.subr.mxu0 0.0
    %801 = vmatpush1.msra.mxu0 0.0
    %802 = vmatprep.subr.mxu0 0.0
    %803 = vmatpush1.msra.mxu0 0.0
    %804 = vmatprep.subr.mxu0 0.0
    %805 = vmatpush1.msra.mxu0 0.0
    %806 = vmatprep.subr.mxu0 0.0
    %807 = vmatpush1.msra.mxu0 0.0
    %808 = vmatprep.subr.mxu0 0.0
    %809 = vmatpush1.msra.mxu0 0.0
    %810 = vmatprep.subr.mxu0 0.0
    %811 = vmatpush1.msra.mxu0 0.0
    %812 = vmatprep.subr.mxu0 0.0
    %813 = vmatpush1.msra.mxu0 0.0
    %814 = vmatprep.subr.mxu0 0.0
    %815 = vmatpush1.msra.mxu0 0.0
    %816 = vmatprep.subr.mxu0 0.0
    %817 = vmatpush1.msra.mxu0 0.0
    %818 = vmatprep.mubr.f32.mxu0 0.0
    %819 = vmatmul.mubr.f32.gmra.mrb[0].mxu0 %v752
    %v820 = vpop.f32.mrb[0].mxu0
    %v821 = vadd.f32 0.0, %v820
    %v822 = vpop.f32.mrb[0].mxu0
    %823 = vdwg.mxu0
    %v824 = vadd.f32 %v748, %v821
    %v825 = vmul.f32 %v824, %v332
    %v826 = vxor.u32 %v825, 2147483648
    %v827 = vmul.f32 %v826, 1.442695
    %v828 = vpow.pop %v827
    %v829 = vadd.f32 %v828, 1.0
    %v830 = vrcp.pop %v829
    %v831 = vmul.f32 1.0, %v830
    %v832 = vmul.f32 %v831, %v332
    %v833 = vsub.f32 %v832, %v333
    %v834 = vmul.f32 %v833, %v740
    %836 = vrot.lane.b32.xlu0 %v833, 64
    %v837 = vpop.permute.xlu0 %836
    %v839 = vmul.f32 %v833, %v837
    %841 = vrot.lane.b32.xlu0 %v839, 32
    %v842 = vpop.permute.xlu0 %841
    %v844 = vadd.f32 %v834, %v842
    %v845 = vtanh.pop %v844
    %847 = vrot.lane.b32.xlu0 %v845, 64
    %v848 = vpop.permute.xlu0 %847
    %v850 = vmul.f32 %v833, %v848
    %s851 = scalar_lea.vmem [#allocation2], 40
    %v852 = vld [vmem:[%s851] sm:$0xff]
    %854 = vrot.lane.b32.xlu0 %v850, 32
    %v855 = vpop.permute.xlu0 %854
    %v856 = vsel %vm185, %v855, 0
    %858 = vmatprep.subr.mxu0 0.0
    %859 = vmatpush1.msra.mxu0 %v323
    %860 = vmatprep.subr.mxu0 0.0
    %861 = vmatpush1.msra.mxu0 %v324
    %862 = vmatprep.subr.mxu0 0.0
    %863 = vmatpush1.msra.mxu0 %v325
    %864 = vmatprep.subr.mxu0 0.0
    %865 = vmatpush1.msra.mxu0 %v326
    %866 = vmatprep.subr.mxu0 0.0
    %867 = vmatpush1.msra.mxu0 0.0
    %868 = vmatprep.subr.mxu0 0.0
    %869 = vmatpush1.msra.mxu0 0.0
    %870 = vmatprep.subr.mxu0 0.0
    %871 = vmatpush1.msra.mxu0 0.0
    %872 = vmatprep.subr.mxu0 0.0
    %873 = vmatpush1.msra.mxu0 0.0
    %874 = vmatprep.subr.mxu0 0.0
    %875 = vmatpush1.msra.mxu0 0.0
    %876 = vmatprep.subr.mxu0 0.0
    %877 = vmatpush1.msra.mxu0 0.0
    %878 = vmatprep.subr.mxu0 0.0
    %879 = vmatpush1.msra.mxu0 0.0
    %880 = vmatprep.subr.mxu0 0.0
    %881 = vmatpush1.msra.mxu0 0.0
    %882 = vmatprep.subr.mxu0 0.0
    %883 = vmatpush1.msra.mxu0 0.0
    %884 = vmatprep.subr.mxu0 0.0
    %885 = vmatpush1.msra.mxu0 0.0
    %886 = vmatprep.subr.mxu0 0.0
    %887 = vmatpush1.msra.mxu0 0.0
    %888 = vmatprep.subr.mxu0 0.0
    %889 = vmatpush1.msra.mxu0 0.0
    %890 = vmatprep.subr.mxu0 0.0
    %891 = vmatpush1.msra.mxu0 0.0
    %892 = vmatprep.subr.mxu0 0.0
    %893 = vmatpush1.msra.mxu0 0.0
    %894 = vmatprep.subr.mxu0 0.0
    %895 = vmatpush1.msra.mxu0 0.0
    %896 = vmatprep.subr.mxu0 0.0
    %897 = vmatpush1.msra.mxu0 0.0
    %898 = vmatprep.subr.mxu0 0.0
    %899 = vmatpush1.msra.mxu0 0.0
    %900 = vmatprep.subr.mxu0 0.0
    %901 = vmatpush1.msra.mxu0 0.0
    %902 = vmatprep.subr.mxu0 0.0
    %903 = vmatpush1.msra.mxu0 0.0
    %904 = vmatprep.subr.mxu0 0.0
    %905 = vmatpush1.msra.mxu0 0.0
    %906 = vmatprep.subr.mxu0 0.0
    %907 = vmatpush1.msra.mxu0 0.0
    %908 = vmatprep.subr.mxu0 0.0
    %909 = vmatpush1.msra.mxu0 0.0
    %910 = vmatprep.subr.mxu0 0.0
    %911 = vmatpush1.msra.mxu0 0.0
    %912 = vmatprep.subr.mxu0 0.0
    %913 = vmatpush1.msra.mxu0 0.0
    %914 = vmatprep.subr.mxu0 0.0
    %915 = vmatpush1.msra.mxu0 0.0
    %916 = vmatprep.subr.mxu0 0.0
    %917 = vmatpush1.msra.mxu0 0.0
    %918 = vmatprep.subr.mxu0 0.0
    %919 = vmatpush1.msra.mxu0 0.0
    %920 = vmatprep.subr.mxu0 0.0
    %921 = vmatpush1.msra.mxu0 0.0
    %922 = vmatprep.mubr.f32.mxu0 0.0
    %923 = vmatmul.mubr.f32.gmra.mrb[0].mxu0 %v856
    %v924 = vpop.f32.mrb[0].mxu0
    %v925 = vadd.f32 0.0, %v924
    %v926 = vpop.f32.mrb[0].mxu0
    %927 = vdwg.mxu0
    %v928 = vadd.f32 %v852, %v925
    %v929 = vmul.f32 %v928, %v332
    %v930 = vxor.u32 %v929, 2147483648
    %v931 = vmul.f32 %v930, 1.442695
    %v932 = vpow.pop %v931
    %v933 = vadd.f32 %v932, 1.0
    %v934 = vrcp.pop %v933
    %v935 = vmul.f32 1.0, %v934
    %v936 = vmul.f32 %v935, %v332
    %v937 = vsub.f32 %v936, %v333
    %v938 = vmul.f32 %v937, %v844
    %940 = vrot.lane.b32.xlu0 %v937, 64
    %v941 = vpop.permute.xlu0 %940
    %v943 = vmul.f32 %v937, %v941
    %945 = vrot.lane.b32.xlu0 %v943, 32
    %v946 = vpop.permute.xlu0 %945
    %v948 = vadd.f32 %v938, %v946
    %v949 = vtanh.pop %v948
    %951 = vrot.lane.b32.xlu0 %v949, 64
    %v952 = vpop.permute.xlu0 %951
    %v954 = vmul.f32 %v937, %v952
    %s955 = scalar_lea.vmem [#allocation2], 48
    %v956 = vld [vmem:[%s955] sm:$0xff]
    %958 = vrot.lane.b32.xlu0 %v954, 32
    %v959 = vpop.permute.xlu0 %958
    %v960 = vsel %vm185, %v959, 0
    %962 = vmatprep.subr.mxu0 0.0
    %963 = vmatpush1.msra.mxu0 %v323
    %964 = vmatprep.subr.mxu0 0.0
    %965 = vmatpush1.msra.mxu0 %v324
    %966 = vmatprep.subr.mxu0 0.0
    %967 = vmatpush1.msra.mxu0 %v325
    %968 = vmatprep.subr.mxu0 0.0
    %969 = vmatpush1.msra.mxu0 %v326
    %970 = vmatprep.subr.mxu0 0.0
    %971 = vmatpush1.msra.mxu0 0.0
    %972 = vmatprep.subr.mxu0 0.0
    %973 = vmatpush1.msra.mxu0 0.0
    %974 = vmatprep.subr.mxu0 0.0
    %975 = vmatpush1.msra.mxu0 0.0
    %976 = vmatprep.subr.mxu0 0.0
    %977 = vmatpush1.msra.mxu0 0.0
    %978 = vmatprep.subr.mxu0 0.0
    %979 = vmatpush1.msra.mxu0 0.0
    %980 = vmatprep.subr.mxu0 0.0
    %981 = vmatpush1.msra.mxu0 0.0
    %982 = vmatprep.subr.mxu0 0.0
    %983 = vmatpush1.msra.mxu0 0.0
    %984 = vmatprep.subr.mxu0 0.0
    %985 = vmatpush1.msra.mxu0 0.0
    %986 = vmatprep.subr.mxu0 0.0
    %987 = vmatpush1.msra.mxu0 0.0
    %988 = vmatprep.subr.mxu0 0.0
    %989 = vmatpush1.msra.mxu0 0.0
    %990 = vmatprep.subr.mxu0 0.0
    %991 = vmatpush1.msra.mxu0 0.0
    %992 = vmatprep.subr.mxu0 0.0
    %993 = vmatpush1.msra.mxu0 0.0
    %994 = vmatprep.subr.mxu0 0.0
    %995 = vmatpush1.msra.mxu0 0.0
    %996 = vmatprep.subr.mxu0 0.0
    %997 = vmatpush1.msra.mxu0 0.0
    %998 = vmatprep.subr.mxu0 0.0
    %999 = vmatpush1.msra.mxu0 0.0
    %1000 = vmatprep.subr.mxu0 0.0
    %1001 = vmatpush1.msra.mxu0 0.0
    %1002 = vmatprep.subr.mxu0 0.0
    %1003 = vmatpush1.msra.mxu0 0.0
    %1004 = vmatprep.subr.mxu0 0.0
    %1005 = vmatpush1.msra.mxu0 0.0
    %1006 = vmatprep.subr.mxu0 0.0
    %1007 = vmatpush1.msra.mxu0 0.0
    %1008 = vmatprep.subr.mxu0 0.0
    %1009 = vmatpush1.msra.mxu0 0.0
    %1010 = vmatprep.subr.mxu0 0.0
    %1011 = vmatpush1.msra.mxu0 0.0
    %1012 = vmatprep.subr.mxu0 0.0
    %1013 = vmatpush1.msra.mxu0 0.0
    %1014 = vmatprep.subr.mxu0 0.0
    %1015 = vmatpush1.msra.mxu0 0.0
    %1016 = vmatprep.subr.mxu0 0.0
    %1017 = vmatpush1.msra.mxu0 0.0
    %1018 = vmatprep.subr.mxu0 0.0
    %1019 = vmatpush1.msra.mxu0 0.0
    %1020 = vmatprep.subr.mxu0 0.0
    %1021 = vmatpush1.msra.mxu0 0.0
    %1022 = vmatprep.subr.mxu0 0.0
    %1023 = vmatpush1.msra.mxu0 0.0
    %1024 = vmatprep.subr.mxu0 0.0
    %1025 = vmatpush1.msra.mxu0 0.0
    %1026 = vmatprep.mubr.f32.mxu0 0.0
    %1027 = vmatmul.mubr.f32.gmra.mrb[0].mxu0 %v960
    %v1028 = vpop.f32.mrb[0].mxu0
    %v1029 = vadd.f32 0.0, %v1028
    %v1030 = vpop.f32.mrb[0].mxu0
    %1031 = vdwg.mxu0
    %v1032 = vadd.f32 %v956, %v1029
    %v1033 = vmul.f32 %v1032, %v332
    %v1034 = vxor.u32 %v1033, 2147483648
    %v1035 = vmul.f32 %v1034, 1.442695
    %v1036 = vpow.pop %v1035
    %v1037 = vadd.f32 %v1036, 1.0
    %v1038 = vrcp.pop %v1037
    %v1039 = vmul.f32 1.0, %v1038
    %v1040 = vmul.f32 %v1039, %v332
    %v1041 = vsub.f32 %v1040, %v333
    %v1042 = vmul.f32 %v1041, %v948
    %1044 = vrot.lane.b32.xlu0 %v1041, 64
    %v1045 = vpop.permute.xlu0 %1044
    %v1047 = vmul.f32 %v1041, %v1045
    %1049 = vrot.lane.b32.xlu0 %v1047, 32
    %v1050 = vpop.permute.xlu0 %1049
    %v1052 = vadd.f32 %v1042, %v1050
    %v1053 = vtanh.pop %v1052
    %1055 = vrot.lane.b32.xlu0 %v1053, 64
    %v1056 = vpop.permute.xlu0 %1055
    %v1058 = vmul.f32 %v1041, %v1056
    %s1059 = scalar_lea.vmem [#allocation2], 56
    %v1060 = vld [vmem:[%s1059] sm:$0xff]
    %1062 = vrot.lane.b32.xlu0 %v1058, 32
    %v1063 = vpop.permute.xlu0 %1062
    %v1064 = vsel %vm185, %v1063, 0
    %1066 = vmatprep.subr.mxu0 0.0
    %1067 = vmatpush1.msra.mxu0 %v323
    %1068 = vmatprep.subr.mxu0 0.0
    %1069 = vmatpush1.msra.mxu0 %v324
    %1070 = vmatprep.subr.mxu0 0.0
    %1071 = vmatpush1.msra.mxu0 %v325
    %1072 = vmatprep.subr.mxu0 0.0
    %1073 = vmatpush1.msra.mxu0 %v326
    %1074 = vmatprep.subr.mxu0 0.0
    %1075 = vmatpush1.msra.mxu0 0.0
    %1076 = vmatprep.subr.mxu0 0.0
    %1077 = vmatpush1.msra.mxu0 0.0
    %1078 = vmatprep.subr.mxu0 0.0
    %1079 = vmatpush1.msra.mxu0 0.0
    %1080 = vmatprep.subr.mxu0 0.0
    %1081 = vmatpush1.msra.mxu0 0.0
    %1082 = vmatprep.subr.mxu0 0.0
    %1083 = vmatpush1.msra.mxu0 0.0
    %1084 = vmatprep.subr.mxu0 0.0
    %1085 = vmatpush1.msra.mxu0 0.0
    %1086 = vmatprep.subr.mxu0 0.0
    %1087 = vmatpush1.msra.mxu0 0.0
    %1088 = vmatprep.subr.mxu0 0.0
    %1089 = vmatpush1.msra.mxu0 0.0
    %1090 = vmatprep.subr.mxu0 0.0
    %1091 = vmatpush1.msra.mxu0 0.0
    %1092 = vmatprep.subr.mxu0 0.0
    %1093 = vmatpush1.msra.mxu0 0.0
    %1094 = vmatprep.subr.mxu0 0.0
    %1095 = vmatpush1.msra.mxu0 0.0
    %1096 = vmatprep.subr.mxu0 0.0
    %1097 = vmatpush1.msra.mxu0 0.0
    %1098 = vmatprep.subr.mxu0 0.0
    %1099 = vmatpush1.msra.mxu0 0.0
    %1100 = vmatprep.subr.mxu0 0.0
    %1101 = vmatpush1.msra.mxu0 0.0
    %1102 = vmatprep.subr.mxu0 0.0
    %1103 = vmatpush1.msra.mxu0 0.0
    %1104 = vmatprep.subr.mxu0 0.0
    %1105 = vmatpush1.msra.mxu0 0.0
    %1106 = vmatprep.subr.mxu0 0.0
    %1107 = vmatpush1.msra.mxu0 0.0
    %1108 = vmatprep.subr.mxu0 0.0
    %1109 = vmatpush1.msra.mxu0 0.0
    %1110 = vmatprep.subr.mxu0 0.0
    %1111 = vmatpush1.msra.mxu0 0.0
    %1112 = vmatprep.subr.mxu0 0.0
    %1113 = vmatpush1.msra.mxu0 0.0
    %1114 = vmatprep.subr.mxu0 0.0
    %1115 = vmatpush1.msra.mxu0 0.0
    %1116 = vmatprep.subr.mxu0 0.0
    %1117 = vmatpush1.msra.mxu0 0.0
    %1118 = vmatprep.subr.mxu0 0.0
    %1119 = vmatpush1.msra.mxu0 0.0
    %1120 = vmatprep.subr.mxu0 0.0
    %1121 = vmatpush1.msra.mxu0 0.0
    %1122 = vmatprep.subr.mxu0 0.0
    %1123 = vmatpush1.msra.mxu0 0.0
    %1124 = vmatprep.subr.mxu0 0.0
    %1125 = vmatpush1.msra.mxu0 0.0
    %1126 = vmatprep.subr.mxu0 0.0
    %1127 = vmatpush1.msra.mxu0 0.0
    %1128 = vmatprep.subr.mxu0 0.0
    %1129 = vmatpush1.msra.mxu0 0.0
    %1130 = vmatprep.mubr.f32.mxu0 0.0
    %1131 = vmatmul.mubr.f32.gmra.mrb[0].mxu0 %v1064
    %v1132 = vpop.f32.mrb[0].mxu0
    %v1133 = vadd.f32 0.0, %v1132
    %v1134 = vpop.f32.mrb[0].mxu0
    %1135 = vdwg.mxu0
    %v1136 = vadd.f32 %v1060, %v1133
    %v1137 = vmul.f32 %v1136, %v332
    %v1138 = vxor.u32 %v1137, 2147483648
    %v1139 = vmul.f32 %v1138, 1.442695
    %v1140 = vpow.pop %v1139
    %v1141 = vadd.f32 %v1140, 1.0
    %v1142 = vrcp.pop %v1141
    %v1143 = vmul.f32 1.0, %v1142
    %v1144 = vmul.f32 %v1143, %v332
    %v1145 = vsub.f32 %v1144, %v333
    %v1146 = vmul.f32 %v1145, %v1052
    %1148 = vrot.lane.b32.xlu0 %v1145, 64
    %v1149 = vpop.permute.xlu0 %1148
    %v1151 = vmul.f32 %v1145, %v1149
    %1153 = vrot.lane.b32.xlu0 %v1151, 32
    %v1154 = vpop.permute.xlu0 %1153
    %v1156 = vadd.f32 %v1146, %v1154
    %v1157 = vtanh.pop %v1156
    %1159 = vrot.lane.b32.xlu0 %v1157, 64
    %v1160 = vpop.permute.xlu0 %1159
    %v1162 = vmul.f32 %v1145, %v1160
    %1164 = vrot.lane.b32.xlu0 %v1162, 32
    %v1165 = vpop.permute.xlu0 %1164
    %1167 = vst.msk [vmem:[#allocation3] sm:$0xff] %vm185, %v1165
    // Predicated region
    $region26: #{tpu_custom_call.1} parent=1 // pred_check
      _
    $region27: #{tpu_custom_call.1} parent=1 // pred_check_branch
      %1169 = sbr.rel (0) target = $region29
    $region28: #{tpu_custom_call.1} parent=1 // pred_region
      %s1171 = ssub.s32 128, 128
      %1172 = vsyncadd [#allocation4], %s1171
      %s1174 = sshll.u32 [#allocation3], 4
      %s1175 = int_to_ptr.vmem [resolvable:$true] %s1174
      %1177 = dma.vmem_to_hbm [thread:$0]  %s1175, 128, %s6, [#allocation4]
    $region29: #{tpu_custom_call.1} parent=1 // pred_fallthru
      _
    // Predicated region
    $region30: #{tpu_custom_call.1} parent=1 // pred_check
      _
    $region31: #{tpu_custom_call.1} parent=1 // pred_check_branch
      %1179 = sbr.rel (0) target = $region33
    $region32: #{tpu_custom_call.1} parent=1 // pred_region
      %1180 = dma.done [#allocation4], 128
    $region33: #{tpu_custom_call.1} parent=1 // pred_fallthru
      _
    %1181 = vsyncpa [#allocation4], 1

</llo_original>
